<compile_context>
chip_gen: v6e
topology: v6e:2x2x1
jax: 0.10.0
libtpu: 0.0.40
codegen_flags: <defaults>
</compile_context>

<pallas_src>
import jax
import jax.numpy as jnp
from jax.experimental import pallas as pl
from jax.experimental.pallas import tpu as pltpu

F32 = jnp.float32
VOCAB_SIZE = 2
LANES = 128


# ----------------------------- Pallas kernel -------------------------------

def _softmax_fc_kernel(x_ref, w_ref, b_ref, o_ref):
    """Fused Softmax2d (over channels) + two Linear heads, one batch element.

    x_ref : (C, HW)       channels on sublanes, pixels on lanes
    w_ref : (4, C, HW)    stacked FC rows [w1_0, w1_1, w2_0, w2_1], NCHW order
    b_ref : (1, 128)      biases in lanes 0..3, zeros elsewhere
    o_ref : (1, 128)      logits written to lanes 0..3
    """
    x = x_ref[...]
    m = jnp.max(x, axis=0, keepdims=True)            # (1, HW) max over channels
    e = jnp.exp(x - m)
    s = e / jnp.sum(e, axis=0, keepdims=True)        # Softmax2d over channel dim

    lane = jax.lax.broadcasted_iota(jnp.int32, (1, LANES), 1)
    acc = b_ref[...]                                  # start from (padded) biases
    for v in range(2 * VOCAB_SIZE):                   # 4 FC rows, unrolled
        t = jnp.sum(s * w_ref[v], axis=1, keepdims=True)   # (C, 1)  lane reduce
        t = jnp.sum(t, axis=0, keepdims=True)               # (1, 1)  sublane reduce
        acc = acc + jnp.where(lane == v, t, 0.0)
    o_ref[...] = acc


# ----------------------------- wrapper --------------------------------------

@jax.jit
def dense_classifier_forward(x, w_all, b_pad):
    """x: (N, C, H, W) NCHW float32 -> (out1, out2), each (N, VOCAB_SIZE)."""
    N, C, H, W = x.shape
    HW = H * W
    x3 = x.reshape(N, C, HW)                          # NCHW view, no data movement

    out = pl.pallas_call(
        _softmax_fc_kernel,
        out_shape=jax.ShapeDtypeStruct((N, 1, LANES), F32),
        grid_spec=pltpu.PrefetchScalarGridSpec(
            num_scalar_prefetch=0,
            grid=(N,),
            in_specs=[
                pl.BlockSpec((None, C, HW), lambda n: (n, 0, 0)),            # x, per batch
                pl.BlockSpec((2 * VOCAB_SIZE, C, HW), lambda n: (0, 0, 0)),  # weights, resident
                pl.BlockSpec((1, LANES), lambda n: (0, 0)),                  # padded biases
            ],
            out_specs=pl.BlockSpec((None, 1, LANES), lambda n: (n, 0, 0)),
        ),
        compiler_params=pltpu.CompilerParams(
            dimension_semantics=("parallel",)),
    )(x3, w_all, b_pad)

    logits = out[:, 0, :2 * VOCAB_SIZE]
    return logits[:, :VOCAB_SIZE], logits[:, VOCAB_SIZE:]


# ----------------------------- parameters -----------------------------------

def init_params(key, in_channels=100, spatial=33):
    """nn.Linear-style init for the two FC heads actually used in forward()."""
    fan_in = in_channels * spatial * spatial          # 33*33*100 = 108900
    bound = float(fan_in) ** -0.5
    k = jax.random.split(key, 4)
    w1 = jax.random.uniform(k[0], (VOCAB_SIZE, in_channels, spatial, spatial),
                            F32, -bound, bound)
    b1 = jax.random.uniform(k[1], (VOCAB_SIZE,), F32, -bound, bound)
    w2 = jax.random.uniform(k[2], (VOCAB_SIZE, in_channels, spatial, spatial),
                            F32, -bound, bound)
    b2 = jax.random.uniform(k[3], (VOCAB_SIZE,), F32, -bound, bound)

    # Pack for the kernel: NCHW-flatten order is preserved by the reshape.
    w_all = jnp.concatenate([w1, w2], axis=0).reshape(
        2 * VOCAB_SIZE, in_channels, spatial * spatial)
    b_pad = jnp.zeros((1, LANES), F32).at[0, :2 * VOCAB_SIZE].set(
        jnp.concatenate([b1, b2]))
    return dict(w1=w1, b1=b1, w2=w2, b2=b2, w_all=w_all, b_pad=b_pad)


# ----------------------------- main ------------------------------------------

if __name__ == "__main__":
    key = jax.random.PRNGKey(0)
    pkey, xkey = jax.random.split(key)

    C, S = 100, 33            # fixed by the module's Linear(33*33*100, VOCAB_SIZE)
    N = 2
    params = init_params(pkey, C, S)
    x = jax.random.normal(xkey, (N, C, S, S), F32)    # NCHW, like the PyTorch module

    out1, out2 = dense_classifier_forward(x, params["w_all"], params["b_pad"])
    jax.block_until_ready((out1, out2))

    # pure-JAX reference for a numerical sanity check
    s = jax.nn.softmax(x, axis=1)                     # Softmax2d over channels
    flat = s.reshape(N, -1)                           # torch .view on NCHW
    ref1 = flat @ params["w1"].reshape(VOCAB_SIZE, -1).T + params["b1"]
    ref2 = flat @ params["w2"].reshape(VOCAB_SIZE, -1).T + params["b2"]

    assert out1.shape == (N, VOCAB_SIZE) and out2.shape == (N, VOCAB_SIZE)
    assert bool(jnp.all(jnp.isfinite(out1))) and bool(jnp.all(jnp.isfinite(out2)))
    assert float(jnp.max(jnp.abs(out1 - ref1))) < 1e-4
    assert float(jnp.max(jnp.abs(out2 - ref2))) < 1e-4
    print("KERNEL_OK")
</pallas_src>

<mosaic_0001>
module attributes {stable_mosaic.version = 11 : i64} {
  func.func @_softmax_fc_kernel(%arg0: i32, %arg1: memref<1x100x1089xf32, #tpu.memory_space<vmem>>, %arg2: memref<4x100x1089xf32, #tpu.memory_space<vmem>>, %arg3: memref<1x128xf32, #tpu.memory_space<vmem>>, %arg4: memref<1x1x128xf32, #tpu.memory_space<vmem>>) attributes {dimension_semantics = [#tpu.dimension_semantics<parallel>], iteration_bounds = array<i64: 2>, scalar_prefetch = 0 : i64, scratch_operands = 0 : i64, tpu.core_type = #tpu.core_type<tc>, window_params = [{transform_indices = @transform_0, window_bounds = array<i64: 1, 100, 1089>}, {pipeline_mode = #tpu.pipeline_mode<synchronous>, transform_indices = @transform_1, window_bounds = array<i64: 4, 100, 1089>}, {pipeline_mode = #tpu.pipeline_mode<synchronous>, transform_indices = @transform_2, window_bounds = array<i64: 1, 128>}, {transform_indices = @transform_3, window_bounds = array<i64: 1, 1, 128>}]} {
    %c0 = arith.constant 0 : index
    %c0_0 = arith.constant 0 : index
    %c0_1 = arith.constant 0 : index
    %0 = vector.load %arg1[%c0, %c0_0, %c0_1] : memref<1x100x1089xf32, #tpu.memory_space<vmem>>, vector<1x100x1089xf32>
    %1 = vector.shape_cast %0 : vector<1x100x1089xf32> to vector<100x1089xf32>
    %cst = arith.constant dense<0xFF800000> : vector<1089xf32>
    %2 = vector.multi_reduction <maximumf>, %1, %cst [0] : vector<100x1089xf32> to vector<1089xf32>
    %3 = vector.shape_cast %2 : vector<1089xf32> to vector<1x1089xf32>
    %4 = vector.broadcast %3 : vector<1x1089xf32> to vector<100x1089xf32>
    %5 = arith.subf %1, %4 : vector<100x1089xf32>
    %6 = math.exp %5 : vector<100x1089xf32>
    %cst_2 = arith.constant dense<0.000000e+00> : vector<1089xf32>
    %7 = vector.multi_reduction <add>, %6, %cst_2 [0] : vector<100x1089xf32> to vector<1089xf32>
    %8 = vector.shape_cast %7 : vector<1089xf32> to vector<1x1089xf32>
    %9 = vector.broadcast %8 : vector<1x1089xf32> to vector<100x1089xf32>
    %10 = arith.divf %6, %9 : vector<100x1089xf32>
    %11 = tpu.iota {dimensions = array<i32: 1>} : vector<1x128xi32>
    %c0_3 = arith.constant 0 : index
    %c0_4 = arith.constant 0 : index
    %12 = vector.load %arg3[%c0_3, %c0_4] : memref<1x128xf32, #tpu.memory_space<vmem>>, vector<1x128xf32>
    %c0_5 = arith.constant 0 : index
    %c0_6 = arith.constant 0 : index
    %c0_7 = arith.constant 0 : index
    %13 = vector.load %arg2[%c0_5, %c0_6, %c0_7] : memref<4x100x1089xf32, #tpu.memory_space<vmem>>, vector<1x100x1089xf32>
    %14 = vector.shape_cast %13 : vector<1x100x1089xf32> to vector<100x1089xf32>
    %15 = arith.mulf %10, %14 : vector<100x1089xf32>
    %cst_8 = arith.constant dense<0.000000e+00> : vector<100xf32>
    %16 = vector.multi_reduction <add>, %15, %cst_8 [1] : vector<100x1089xf32> to vector<100xf32>
    %17 = vector.shape_cast %16 : vector<100xf32> to vector<100x1xf32>
    %cst_9 = arith.constant dense<0.000000e+00> : vector<1xf32>
    %18 = vector.multi_reduction <add>, %17, %cst_9 [0] : vector<100x1xf32> to vector<1xf32>
    %19 = vector.shape_cast %18 : vector<1xf32> to vector<1x1xf32>
    %c0_i32 = arith.constant 0 : i32
    %20 = vector.broadcast %c0_i32 : i32 to vector<1x128xi32>
    %21 = arith.cmpi eq, %11, %20 : vector<1x128xi32>
    %cst_10 = arith.constant 0.000000e+00 : f32
    %22 = vector.shape_cast %19 : vector<1x1xf32> to vector<1x1xf32>
    %23 = vector.broadcast %22 : vector<1x1xf32> to vector<1x128xf32>
    %24 = vector.broadcast %cst_10 : f32 to vector<1x128xf32>
    %25 = arith.select %21, %23, %24 : vector<1x128xi1>, vector<1x128xf32>
    %26 = arith.addf %12, %25 : vector<1x128xf32>
    %c1 = arith.constant 1 : index
    %c0_11 = arith.constant 0 : index
    %c0_12 = arith.constant 0 : index
    %27 = vector.load %arg2[%c1, %c0_11, %c0_12] : memref<4x100x1089xf32, #tpu.memory_space<vmem>>, vector<1x100x1089xf32>
    %28 = vector.shape_cast %27 : vector<1x100x1089xf32> to vector<100x1089xf32>
    %29 = arith.mulf %10, %28 : vector<100x1089xf32>
    %cst_13 = arith.constant dense<0.000000e+00> : vector<100xf32>
    %30 = vector.multi_reduction <add>, %29, %cst_13 [1] : vector<100x1089xf32> to vector<100xf32>
    %31 = vector.shape_cast %30 : vector<100xf32> to vector<100x1xf32>
    %cst_14 = arith.constant dense<0.000000e+00> : vector<1xf32>
    %32 = vector.multi_reduction <add>, %31, %cst_14 [0] : vector<100x1xf32> to vector<1xf32>
    %33 = vector.shape_cast %32 : vector<1xf32> to vector<1x1xf32>
    %c1_i32 = arith.constant 1 : i32
    %34 = vector.broadcast %c1_i32 : i32 to vector<1x128xi32>
    %35 = arith.cmpi eq, %11, %34 : vector<1x128xi32>
    %cst_15 = arith.constant 0.000000e+00 : f32
    %36 = vector.shape_cast %33 : vector<1x1xf32> to vector<1x1xf32>
    %37 = vector.broadcast %36 : vector<1x1xf32> to vector<1x128xf32>
    %38 = vector.broadcast %cst_15 : f32 to vector<1x128xf32>
    %39 = arith.select %35, %37, %38 : vector<1x128xi1>, vector<1x128xf32>
    %40 = arith.addf %26, %39 : vector<1x128xf32>
    %c2 = arith.constant 2 : index
    %c0_16 = arith.constant 0 : index
    %c0_17 = arith.constant 0 : index
    %41 = vector.load %arg2[%c2, %c0_16, %c0_17] : memref<4x100x1089xf32, #tpu.memory_space<vmem>>, vector<1x100x1089xf32>
    %42 = vector.shape_cast %41 : vector<1x100x1089xf32> to vector<100x1089xf32>
    %43 = arith.mulf %10, %42 : vector<100x1089xf32>
    %cst_18 = arith.constant dense<0.000000e+00> : vector<100xf32>
    %44 = vector.multi_reduction <add>, %43, %cst_18 [1] : vector<100x1089xf32> to vector<100xf32>
    %45 = vector.shape_cast %44 : vector<100xf32> to vector<100x1xf32>
    %cst_19 = arith.constant dense<0.000000e+00> : vector<1xf32>
    %46 = vector.multi_reduction <add>, %45, %cst_19 [0] : vector<100x1xf32> to vector<1xf32>
    %47 = vector.shape_cast %46 : vector<1xf32> to vector<1x1xf32>
    %c2_i32 = arith.constant 2 : i32
    %48 = vector.broadcast %c2_i32 : i32 to vector<1x128xi32>
    %49 = arith.cmpi eq, %11, %48 : vector<1x128xi32>
    %cst_20 = arith.constant 0.000000e+00 : f32
    %50 = vector.shape_cast %47 : vector<1x1xf32> to vector<1x1xf32>
    %51 = vector.broadcast %50 : vector<1x1xf32> to vector<1x128xf32>
    %52 = vector.broadcast %cst_20 : f32 to vector<1x128xf32>
    %53 = arith.select %49, %51, %52 : vector<1x128xi1>, vector<1x128xf32>
    %54 = arith.addf %40, %53 : vector<1x128xf32>
    %c3 = arith.constant 3 : index
    %c0_21 = arith.constant 0 : index
    %c0_22 = arith.constant 0 : index
    %55 = vector.load %arg2[%c3, %c0_21, %c0_22] : memref<4x100x1089xf32, #tpu.memory_space<vmem>>, vector<1x100x1089xf32>
    %56 = vector.shape_cast %55 : vector<1x100x1089xf32> to vector<100x1089xf32>
    %57 = arith.mulf %10, %56 : vector<100x1089xf32>
    %cst_23 = arith.constant dense<0.000000e+00> : vector<100xf32>
    %58 = vector.multi_reduction <add>, %57, %cst_23 [1] : vector<100x1089xf32> to vector<100xf32>
    %59 = vector.shape_cast %58 : vector<100xf32> to vector<100x1xf32>
    %cst_24 = arith.constant dense<0.000000e+00> : vector<1xf32>
    %60 = vector.multi_reduction <add>, %59, %cst_24 [0] : vector<100x1xf32> to vector<1xf32>
    %61 = vector.shape_cast %60 : vector<1xf32> to vector<1x1xf32>
    %c3_i32 = arith.constant 3 : i32
    %62 = vector.broadcast %c3_i32 : i32 to vector<1x128xi32>
    %63 = arith.cmpi eq, %11, %62 : vector<1x128xi32>
    %cst_25 = arith.constant 0.000000e+00 : f32
    %64 = vector.shape_cast %61 : vector<1x1xf32> to vector<1x1xf32>
    %65 = vector.broadcast %64 : vector<1x1xf32> to vector<1x128xf32>
    %66 = vector.broadcast %cst_25 : f32 to vector<1x128xf32>
    %67 = arith.select %63, %65, %66 : vector<1x128xi1>, vector<1x128xf32>
    %68 = arith.addf %54, %67 : vector<1x128xf32>
    %c0_26 = arith.constant 0 : index
    %c0_27 = arith.constant 0 : index
    %c0_28 = arith.constant 0 : index
    %69 = vector.load %arg4[%c0_26, %c0_27, %c0_28] : memref<1x1x128xf32, #tpu.memory_space<vmem>>, vector<1x1x128xf32>
    %70 = vector.shape_cast %69 : vector<1x1x128xf32> to vector<1x128xf32>
    %71 = vector.shape_cast %68 : vector<1x128xf32> to vector<1x1x128xf32>
    tpu.vector_store %arg4[%c0_26, %c0_27, %c0_28], %71 {strides = array<i32>} : memref<1x1x128xf32, #tpu.memory_space<vmem>>, vector<1x1x128xf32>,
    return
  }
  func.func @transform_0(%arg0: i32) -> (i32, i32, i32) {
    %c0_i32 = arith.constant 0 : i32
    %c0_i32_0 = arith.constant 0 : i32
    %c0_i32_1 = arith.constant 0 : i32
    return %arg0, %c0_i32, %c0_i32_0 : i32, i32, i32
  }
  func.func @transform_1(%arg0: i32) -> (i32, i32, i32) {
    %c0_i32 = arith.constant 0 : i32
    %c0_i32_0 = arith.constant 0 : i32
    %c0_i32_1 = arith.constant 0 : i32
    %c0_i32_2 = arith.constant 0 : i32
    return %c0_i32, %c0_i32_0, %c0_i32_1 : i32, i32, i32
  }
  func.func @transform_2(%arg0: i32) -> (i32, i32) {
    %c0_i32 = arith.constant 0 : i32
    %c0_i32_0 = arith.constant 0 : i32
    %c0_i32_1 = arith.constant 0 : i32
    return %c0_i32, %c0_i32_0 : i32, i32
  }
  func.func @transform_3(%arg0: i32) -> (i32, i32, i32) {
    %c0_i32 = arith.constant 0 : i32
    %c0_i32_0 = arith.constant 0 : i32
    %c0_i32_1 = arith.constant 0 : i32
    return %arg0, %c0_i32, %c0_i32_0 : i32, i32, i32
  }
}

</mosaic_0001>

<llo_original>
// kernel: dense_classifier_forward.1
$region0: #{dense_classifier_forward.1}
  #allocation0 [shape = 'u32[]', space=smem, size = 0x4, offset = 0x4, fixed_abs, tag = 'smem constant byte address 0x4 - core index']
  #allocation1 [shape = 'u32[144,128]{1,0:T(1,128)}', space=vmem, size = 0x12000, scoped, tag = 'internal scratch']
  %s0 = inlined_call_operand.vmem [shape: f32[2,100,1089], index: 0, kind: input, shape index: {}]
  %s1 = inlined_call_operand.vmem [shape: f32[4,100,1089], index: 1, kind: input, shape index: {}]
  %s2 = inlined_call_operand.vmem [shape: f32[1,128], index: 2, kind: input, shape index: {}]
  %s3 = inlined_call_operand.vmem [shape: f32[2,1,128], index: 3, kind: output, shape index: {}]
  %s4 = sld [smem:[#allocation0]]
  $region45: #{dense_classifier_forward.1} parent=0
    _
  %s6 = ssub.s32 1, %s4
  %s7 = scalar_select 0, %s6, %s4
  loop: start=0, step=1, limit=4
  $region2: #{dense_classifier_forward.1} parent=0 // loop_pre_header
    _
  $region3: #{dense_classifier_forward.1} parent=0 // loop_header
    %s9 = sphi 0, %s13
    %p10 = scmp.ge.s32.totalorder %s9, 4
    %s19 = sphi 0, %s21
    %s22 = sphi 0, %s19
    %s23 = sphi 0, %s22
    %s39 = sphi 0, %s23
    %s43 = sphi 0, %s43
    %s45 = sphi 0, %s43
    %s46 = sphi 0, %s45
    %s60 = sphi 0, %s46
    %s64 = sphi 0, %s64
    %s66 = sphi 0, %s64
    %s67 = sphi 0, %s66
    %s81 = sphi 0, %s67
    %s87 = sphi 0, %s89
    %s90 = sphi 0, %s87
    %s91 = sphi 0, %s90
    %s107 = sphi 0, %s91
  $region4: #{dense_classifier_forward.1} parent=0 // loop_header_branch
    %12 = sbr.rel (%p10) target = $region8
  $region5: #{dense_classifier_forward.1} parent=0 // loop_body
    %s14 = ssub.s32 %s9, 1
    %s15 = ssub.s32 %s9, 2
    %s16 = sadd.s32 %s9, 1
    %s17 = ssub.s32 %s9, %s16
    %p18 = scmp.eq.s32.totalorder %s17, 0
    %s20 = sadd.s32 %s19, 1
    %s21 = scalar_select %p18, %s19, %s20
    %p24 = pneg %p18
    %p25 = scmp.eq.s32.totalorder %s9, 1
    %p26 = por %p24, %p25
    %p27 = scmp.ne.s32.totalorder %s19, %s22
    %p28 = scmp.eq.s32.totalorder %s9, 0
    %p29 = por %p27, %p28
    %p30 = scmp.ne.s32.totalorder %s19, %s22
    %p31 = scmp.eq.s32.totalorder %s14, 1
    %p32 = por %p30, %p31
    %p33 = scmp.ne.s32.totalorder %s22, %s23
    %p34 = scmp.eq.s32.totalorder %s14, 0
    %p35 = por %p33, %p34
    %p36 = scmp.ne.s32.totalorder %s22, %s23
    %p37 = scmp.eq.s32.totalorder %s15, 1
    %p38 = por %p36, %p37
    %p40 = scmp.ne.s32.totalorder %s23, %s39
    %p41 = scmp.eq.s32.totalorder %s15, 0
    %p42 = por %p40, %p41
    %s44 = sadd.s32 %s43, 1
    %p47 = scmp.eq.s32.totalorder %s9, 1
    %p48 = scmp.ne.s32.totalorder %s43, %s45
    %p49 = scmp.eq.s32.totalorder %s9, 0
    %p50 = por %p48, %p49
    %p51 = scmp.ne.s32.totalorder %s43, %s45
    %p52 = scmp.eq.s32.totalorder %s14, 1
    %p53 = por %p51, %p52
    %p54 = scmp.ne.s32.totalorder %s45, %s46
    %p55 = scmp.eq.s32.totalorder %s14, 0
    %p56 = por %p54, %p55
    %p57 = scmp.ne.s32.totalorder %s45, %s46
    %p58 = scmp.eq.s32.totalorder %s15, 1
    %p59 = por %p57, %p58
    %p61 = scmp.ne.s32.totalorder %s46, %s60
    %p62 = scmp.eq.s32.totalorder %s15, 0
    %p63 = por %p61, %p62
    %s65 = sadd.s32 %s64, 1
    %p68 = scmp.eq.s32.totalorder %s9, 1
    %p69 = scmp.ne.s32.totalorder %s64, %s66
    %p70 = scmp.eq.s32.totalorder %s9, 0
    %p71 = por %p69, %p70
    %p72 = scmp.ne.s32.totalorder %s64, %s66
    %p73 = scmp.eq.s32.totalorder %s14, 1
    %p74 = por %p72, %p73
    %p75 = scmp.ne.s32.totalorder %s66, %s67
    %p76 = scmp.eq.s32.totalorder %s14, 0
    %p77 = por %p75, %p76
    %p78 = scmp.ne.s32.totalorder %s66, %s67
    %p79 = scmp.eq.s32.totalorder %s15, 1
    %p80 = por %p78, %p79
    %p82 = scmp.ne.s32.totalorder %s67, %s81
    %p83 = scmp.eq.s32.totalorder %s15, 0
    %p84 = por %p82, %p83
    %s85 = ssub.s32 %s9, %s16
    %p86 = scmp.eq.s32.totalorder %s85, 0
    %s88 = sadd.s32 %s87, 1
    %s89 = scalar_select %p86, %s87, %s88
    %p92 = pneg %p86
    %p93 = scmp.eq.s32.totalorder %s9, 1
    %p94 = por %p92, %p93
    %p95 = scmp.ne.s32.totalorder %s87, %s90
    %p96 = scmp.eq.s32.totalorder %s9, 0
    %p97 = por %p95, %p96
    %p98 = scmp.ne.s32.totalorder %s87, %s90
    %p99 = scmp.eq.s32.totalorder %s14, 1
    %p100 = por %p98, %p99
    %p101 = scmp.ne.s32.totalorder %s90, %s91
    %p102 = scmp.eq.s32.totalorder %s14, 0
    %p103 = por %p101, %p102
    %p104 = scmp.ne.s32.totalorder %s90, %s91
    %p105 = scmp.eq.s32.totalorder %s15, 1
    %p106 = por %p104, %p105
    %p108 = scmp.ne.s32.totalorder %s91, %s107
    %p109 = scmp.eq.s32.totalorder %s15, 0
    %p110 = por %p108, %p109
    %p111 = scmp.le.s32.totalorder 1, %s9
    %p112 = scmp.lt.s32.totalorder %s9, 3
    %p113 = pnand %p111, %p112
    %p114 = pneg %p113
    // Predicated region
    $region9: #{dense_classifier_forward.1} parent=5 // pred_check
      _
    $region10: #{dense_classifier_forward.1} parent=5 // pred_check_branch
      %116 = sbr.rel (%p113) target = $region12
    $region11: #{dense_classifier_forward.1} parent=5 // pred_region
      %s117 = ssub.s32 %s9, 1
      // Predicated region
      $region13: #{dense_classifier_forward.1} parent=11 // pred_check
        %p118 = pneg %p56
      $region14: #{dense_classifier_forward.1} parent=11 // pred_check_branch
        %120 = sbr.rel (%p118) target = $region16
      $region15: #{dense_classifier_forward.1} parent=11 // pred_region
        _
      $region16: #{dense_classifier_forward.1} parent=11 // pred_fallthru
        _
      // Predicated region
      $region17: #{dense_classifier_forward.1} parent=11 // pred_check
        %p121 = pneg %p77
      $region18: #{dense_classifier_forward.1} parent=11 // pred_check_branch
        %123 = sbr.rel (%p121) target = $region20
      $region19: #{dense_classifier_forward.1} parent=11 // pred_region
        _
      $region20: #{dense_classifier_forward.1} parent=11 // pred_fallthru
        _
    $region12: #{dense_classifier_forward.1} parent=5 // pred_fallthru
      _
    %p124 = scmp.lt.s32.totalorder %s9, 2
    // Predicated region
    $region21: #{dense_classifier_forward.1} parent=5 // pred_check
      %p125 = pneg %p124
    $region22: #{dense_classifier_forward.1} parent=5 // pred_check_branch
      %127 = sbr.rel (%p125) target = $region24
    $region23: #{dense_classifier_forward.1} parent=5 // pred_region
      // Predicated region
      $region25: #{dense_classifier_forward.1} parent=23 // pred_check
        %p128 = pneg %p29
      $region26: #{dense_classifier_forward.1} parent=23 // pred_check_branch
        %130 = sbr.rel (%p128) target = $region28
      $region27: #{dense_classifier_forward.1} parent=23 // pred_region
        %p131 = scmp.lt.s32.totalorder %s9, 1
        %s132 = scalar_select %p131, %s9, 1
        %s133 = smul.addr %s132, 117
        %s134 = smul.addr %s133, 8
        %s135 = scalar_lea.vmem %s0, %s134
      $region28: #{dense_classifier_forward.1} parent=23 // pred_fallthru
        _
    $region24: #{dense_classifier_forward.1} parent=5 // pred_fallthru
      _
    %p136 = scmp.le.s32.totalorder 1, %s9
    %p137 = scmp.lt.s32.totalorder %s9, 3
    %p138 = pnand %p136, %p137
    %p139 = pneg %p138
    // Predicated region
    $region29: #{dense_classifier_forward.1} parent=5 // pred_check
      _
    $region30: #{dense_classifier_forward.1} parent=5 // pred_check_branch
      %141 = sbr.rel (%p138) target = $region32
    $region31: #{dense_classifier_forward.1} parent=5 // pred_region
      %s142 = ssub.s32 %s9, 1
      %p143 = scmp.lt.s32.totalorder %s14, 1
      %s144 = scalar_select %p143, %s14, 1
      %s145 = smul.addr %s144, 117
      %s146 = smul.addr %s145, 8
      %s147 = scalar_lea.vmem %s0, %s146
      %p148 = pneg %p35
      %p149 = pneg %p32
      %p150 = pneg %p56
      %p151 = pneg %p53
      %p152 = pneg %p77
      %p153 = pneg %p74
      %p154 = pneg %p103
      %p155 = pneg %p100
      %p156 = scmp.lt.s32.totalorder %s14, 1
      %s157 = scalar_select %p156, %s14, 1
      %s158 = scalar_lea.vmem %s3, %s157
      %p159 = scmp.lt.s32.totalorder %s14, 1
      %s160 = scalar_select %p159, %s14, 1
      %s161 = smul.addr %s160, 117
      %s162 = smul.addr %s161, 8
      %s163 = scalar_lea.vmem %s0, %s162
      %p164 = scmp.lt.s32.totalorder %s14, 1
      %s165 = scalar_select %p164, %s14, 1
      %s166 = scalar_lea.vmem %s3, %s165
      %v167 = vld [vmem:[%s163] sm:$0xff]
      %v168 = vld [vmem:[%s163 + $0x8] sm:$0xff]
      %v169 = vld [vmem:[%s163 + $0x10] sm:$0xff]
      %v170 = vld [vmem:[%s163 + $0x18] sm:$0xff]
      %v171 = vld [vmem:[%s163 + $0x20] sm:$0xff]
      %v172 = vld [vmem:[%s163 + $0x28] sm:$0xff]
      %v173 = vld [vmem:[%s163 + $0x30] sm:$0xff]
      %v174 = vld [vmem:[%s163 + $0x38] sm:$0xff]
      %v175 = vld [vmem:[%s163 + $0x40] sm:$0xff]
      %v176 = vld [vmem:[%s163 + $0x48] sm:$0xff]
      %v177 = vld [vmem:[%s163 + $0x50] sm:$0xff]
      %v178 = vld [vmem:[%s163 + $0x58] sm:$0xff]
      %v179 = vld [vmem:[%s163 + $0x60] sm:$0xff]
      %v180 = vld [vmem:[%s163 + $0x68] sm:$0xff]
      %v181 = vld [vmem:[%s163 + $0x70] sm:$0xff]
      %v182 = vld [vmem:[%s163 + $0x78] sm:$0xff]
      %v183 = vld [vmem:[%s163 + $0x80] sm:$0xff]
      %v184 = vld [vmem:[%s163 + $0x88] sm:$0xff]
      %v185 = vld [vmem:[%s163 + $0x90] sm:$0xff]
      %v186 = vld [vmem:[%s163 + $0x98] sm:$0xff]
      %v187 = vld [vmem:[%s163 + $0xa0] sm:$0xff]
      %v188 = vld [vmem:[%s163 + $0xa8] sm:$0xff]
      %v189 = vld [vmem:[%s163 + $0xb0] sm:$0xff]
      %v190 = vld [vmem:[%s163 + $0xb8] sm:$0xff]
      %v191 = vld [vmem:[%s163 + $0xc0] sm:$0xff]
      %v192 = vld [vmem:[%s163 + $0xc8] sm:$0xff]
      %v193 = vld [vmem:[%s163 + $0xd0] sm:$0xff]
      %v194 = vld [vmem:[%s163 + $0xd8] sm:$0xff]
      %v195 = vld [vmem:[%s163 + $0xe0] sm:$0xff]
      %v196 = vld [vmem:[%s163 + $0xe8] sm:$0xff]
      %v197 = vld [vmem:[%s163 + $0xf0] sm:$0xff]
      %v198 = vld [vmem:[%s163 + $0xf8] sm:$0xff]
      %v199 = vld [vmem:[%s163 + $0x100] sm:$0xff]
      %v200 = vld [vmem:[%s163 + $0x108] sm:$0xff]
      %v201 = vld [vmem:[%s163 + $0x110] sm:$0xff]
      %v202 = vld [vmem:[%s163 + $0x118] sm:$0xff]
      %v203 = vld [vmem:[%s163 + $0x120] sm:$0xff]
      %v204 = vld [vmem:[%s163 + $0x128] sm:$0xff]
      %v205 = vld [vmem:[%s163 + $0x130] sm:$0xff]
      %v206 = vld [vmem:[%s163 + $0x138] sm:$0xff]
      %v207 = vld [vmem:[%s163 + $0x140] sm:$0xff]
      %v208 = vld [vmem:[%s163 + $0x148] sm:$0xff]
      %v209 = vld [vmem:[%s163 + $0x150] sm:$0xff]
      %v210 = vld [vmem:[%s163 + $0x158] sm:$0xff]
      %v211 = vld [vmem:[%s163 + $0x160] sm:$0xff]
      %v212 = vld [vmem:[%s163 + $0x168] sm:$0xff]
      %v213 = vld [vmem:[%s163 + $0x170] sm:$0xff]
      %v214 = vld [vmem:[%s163 + $0x178] sm:$0xff]
      %v215 = vld [vmem:[%s163 + $0x180] sm:$0xff]
      %v216 = vld [vmem:[%s163 + $0x188] sm:$0xff]
      %v217 = vld [vmem:[%s163 + $0x190] sm:$0xff]
      %v218 = vld [vmem:[%s163 + $0x198] sm:$0xff]
      %v219 = vld [vmem:[%s163 + $0x1a0] sm:$0xff]
      %v220 = vld [vmem:[%s163 + $0x1a8] sm:$0xff]
      %v221 = vld [vmem:[%s163 + $0x1b0] sm:$0xff]
      %v222 = vld [vmem:[%s163 + $0x1b8] sm:$0xff]
      %v223 = vld [vmem:[%s163 + $0x1c0] sm:$0xff]
      %v224 = vld [vmem:[%s163 + $0x1c8] sm:$0xff]
      %v225 = vld [vmem:[%s163 + $0x1d0] sm:$0xff]
      %v226 = vld [vmem:[%s163 + $0x1d8] sm:$0xff]
      %v227 = vld [vmem:[%s163 + $0x1e0] sm:$0xff]
      %v228 = vld [vmem:[%s163 + $0x1e8] sm:$0xff]
      %v229 = vld [vmem:[%s163 + $0x1f0] sm:$0xff]
      %v230 = vld [vmem:[%s163 + $0x1f8] sm:$0xff]
      %v231 = vld [vmem:[%s163 + $0x200] sm:$0xff]
      %v232 = vld [vmem:[%s163 + $0x208] sm:$0xff]
      %v233 = vld [vmem:[%s163 + $0x210] sm:$0xff]
      %v234 = vld [vmem:[%s163 + $0x218] sm:$0xff]
      %v235 = vld [vmem:[%s163 + $0x220] sm:$0xff]
      %v236 = vld [vmem:[%s163 + $0x228] sm:$0xff]
      %v237 = vld [vmem:[%s163 + $0x230] sm:$0xff]
      %v238 = vld [vmem:[%s163 + $0x238] sm:$0xff]
      %v239 = vld [vmem:[%s163 + $0x240] sm:$0xff]
      %v240 = vld [vmem:[%s163 + $0x248] sm:$0xff]
      %v241 = vld [vmem:[%s163 + $0x250] sm:$0xff]
      %v242 = vld [vmem:[%s163 + $0x258] sm:$0xff]
      %v243 = vld [vmem:[%s163 + $0x260] sm:$0xff]
      %v244 = vld [vmem:[%s163 + $0x268] sm:$0xff]
      %v245 = vld [vmem:[%s163 + $0x270] sm:$0xff]
      %v246 = vld [vmem:[%s163 + $0x278] sm:$0xff]
      %v247 = vld [vmem:[%s163 + $0x280] sm:$0xff]
      %v248 = vld [vmem:[%s163 + $0x288] sm:$0xff]
      %v249 = vld [vmem:[%s163 + $0x290] sm:$0xff]
      %v250 = vld [vmem:[%s163 + $0x298] sm:$0xff]
      %v251 = vld [vmem:[%s163 + $0x2a0] sm:$0xff]
      %v252 = vld [vmem:[%s163 + $0x2a8] sm:$0xff]
      %v253 = vld [vmem:[%s163 + $0x2b0] sm:$0xff]
      %v254 = vld [vmem:[%s163 + $0x2b8] sm:$0xff]
      %v255 = vld [vmem:[%s163 + $0x2c0] sm:$0xff]
      %v256 = vld [vmem:[%s163 + $0x2c8] sm:$0xff]
      %v257 = vld [vmem:[%s163 + $0x2d0] sm:$0xff]
      %v258 = vld [vmem:[%s163 + $0x2d8] sm:$0xff]
      %v259 = vld [vmem:[%s163 + $0x2e0] sm:$0xff]
      %v260 = vld [vmem:[%s163 + $0x2e8] sm:$0xff]
      %v261 = vld [vmem:[%s163 + $0x2f0] sm:$0xff]
      %v262 = vld [vmem:[%s163 + $0x2f8] sm:$0xff]
      %v263 = vld [vmem:[%s163 + $0x300] sm:$0xff]
      %v264 = vld [vmem:[%s163 + $0x308] sm:$0xff]
      %v265 = vld [vmem:[%s163 + $0x310] sm:$0xff]
      %v266 = vld [vmem:[%s163 + $0x318] sm:$0xff]
      %v267 = vld [vmem:[%s163 + $0x320] sm:$0xff]
      %v268 = vld [vmem:[%s163 + $0x328] sm:$0xff]
      %v269 = vld [vmem:[%s163 + $0x330] sm:$0xff]
      %v270 = vld [vmem:[%s163 + $0x338] sm:$0xff]
      %v271 = vld [vmem:[%s163 + $0x340] sm:$0xff]
      %v272 = vld [vmem:[%s163 + $0x348] sm:$0xff]
      %v273 = vld [vmem:[%s163 + $0x350] sm:$0xff]
      %v274 = vld [vmem:[%s163 + $0x358] sm:$0xff]
      %v275 = vld [vmem:[%s163 + $0x360] sm:$0xf]
      %v276 = vld [vmem:[%s163 + $0x368] sm:$0xf]
      %v277 = vld [vmem:[%s163 + $0x370] sm:$0xf]
      %v278 = vld [vmem:[%s163 + $0x378] sm:$0xf]
      %v279 = vld [vmem:[%s163 + $0x380] sm:$0xf]
      %v280 = vld [vmem:[%s163 + $0x388] sm:$0xf]
      %v281 = vld [vmem:[%s163 + $0x390] sm:$0xf]
      %v282 = vld [vmem:[%s163 + $0x398] sm:$0xf]
      %v283 = vld [vmem:[%s163 + $0x3a0] sm:$0xf]
      %v284 = vmax.f32 %v167, %v176
      %v285 = vmax.f32 %v284, %v185
      %v286 = vmax.f32 %v285, %v194
      %v287 = vmax.f32 %v286, %v203
      %v288 = vmax.f32 %v287, %v212
      %v289 = vmax.f32 %v288, %v221
      %v290 = vmax.f32 %v289, %v230
      %v291 = vmax.f32 %v290, %v239
      %v292 = vmax.f32 %v291, %v248
      %v293 = vmax.f32 %v292, %v257
      %v294 = vmax.f32 %v293, %v266
      %vm295 = vcmask 1043456
      %v296 = vsel %vm295, %v275, -inf
      %v297 = vmax.f32 %v294, %v296
      %v298 = vrot.slane %v297, 4
      %v299 = vmax.f32 %v297, %v298
      %v300 = vrot.slane %v299, 2
      %v301 = vmax.f32 %v299, %v300
      %v302 = vrot.slane %v301, 1
      %v303 = vmax.f32 %v301, %v302
      %v304 = vmax.f32 %v168, %v177
      %v305 = vmax.f32 %v304, %v186
      %v306 = vmax.f32 %v305, %v195
      %v307 = vmax.f32 %v306, %v204
      %v308 = vmax.f32 %v307, %v213
      %v309 = vmax.f32 %v308, %v222
      %v310 = vmax.f32 %v309, %v231
      %v311 = vmax.f32 %v310, %v240
      %v312 = vmax.f32 %v311, %v249
      %v313 = vmax.f32 %v312, %v258
      %v314 = vmax.f32 %v313, %v267
      %v315 = vsel %vm295, %v276, -inf
      %v316 = vmax.f32 %v314, %v315
      %v317 = vrot.slane %v316, 4
      %v318 = vmax.f32 %v316, %v317
      %v319 = vrot.slane %v318, 2
      %v320 = vmax.f32 %v318, %v319
      %v321 = vrot.slane %v320, 1
      %v322 = vmax.f32 %v320, %v321
      %v323 = vmax.f32 %v169, %v178
      %v324 = vmax.f32 %v323, %v187
      %v325 = vmax.f32 %v324, %v196
      %v326 = vmax.f32 %v325, %v205
      %v327 = vmax.f32 %v326, %v214
      %v328 = vmax.f32 %v327, %v223
      %v329 = vmax.f32 %v328, %v232
      %v330 = vmax.f32 %v329, %v241
      %v331 = vmax.f32 %v330, %v250
      %v332 = vmax.f32 %v331, %v259
      %v333 = vmax.f32 %v332, %v268
      %v334 = vsel %vm295, %v277, -inf
      %v335 = vmax.f32 %v333, %v334
      %v336 = vrot.slane %v335, 4
      %v337 = vmax.f32 %v335, %v336
      %v338 = vrot.slane %v337, 2
      %v339 = vmax.f32 %v337, %v338
      %v340 = vrot.slane %v339, 1
      %v341 = vmax.f32 %v339, %v340
      %v342 = vmax.f32 %v170, %v179
      %v343 = vmax.f32 %v342, %v188
      %v344 = vmax.f32 %v343, %v197
      %v345 = vmax.f32 %v344, %v206
      %v346 = vmax.f32 %v345, %v215
      %v347 = vmax.f32 %v346, %v224
      %v348 = vmax.f32 %v347, %v233
      %v349 = vmax.f32 %v348, %v242
      %v350 = vmax.f32 %v349, %v251
      %v351 = vmax.f32 %v350, %v260
      %v352 = vmax.f32 %v351, %v269
      %v353 = vsel %vm295, %v278, -inf
      %v354 = vmax.f32 %v352, %v353
      %v355 = vrot.slane %v354, 4
      %v356 = vmax.f32 %v354, %v355
      %v357 = vrot.slane %v356, 2
      %v358 = vmax.f32 %v356, %v357
      %v359 = vrot.slane %v358, 1
      %v360 = vmax.f32 %v358, %v359
      %v361 = vmax.f32 %v171, %v180
      %v362 = vmax.f32 %v361, %v189
      %v363 = vmax.f32 %v362, %v198
      %v364 = vmax.f32 %v363, %v207
      %v365 = vmax.f32 %v364, %v216
      %v366 = vmax.f32 %v365, %v225
      %v367 = vmax.f32 %v366, %v234
      %v368 = vmax.f32 %v367, %v243
      %v369 = vmax.f32 %v368, %v252
      %v370 = vmax.f32 %v369, %v261
      %v371 = vmax.f32 %v370, %v270
      %v372 = vsel %vm295, %v279, -inf
      %v373 = vmax.f32 %v371, %v372
      %v374 = vrot.slane %v373, 4
      %v375 = vmax.f32 %v373, %v374
      %v376 = vrot.slane %v375, 2
      %v377 = vmax.f32 %v375, %v376
      %v378 = vrot.slane %v377, 1
      %v379 = vmax.f32 %v377, %v378
      %v380 = vmax.f32 %v172, %v181
      %v381 = vmax.f32 %v380, %v190
      %v382 = vmax.f32 %v381, %v199
      %v383 = vmax.f32 %v382, %v208
      %v384 = vmax.f32 %v383, %v217
      %v385 = vmax.f32 %v384, %v226
      %v386 = vmax.f32 %v385, %v235
      %v387 = vmax.f32 %v386, %v244
      %v388 = vmax.f32 %v387, %v253
      %v389 = vmax.f32 %v388, %v262
      %v390 = vmax.f32 %v389, %v271
      %v391 = vsel %vm295, %v280, -inf
      %v392 = vmax.f32 %v390, %v391
      %v393 = vrot.slane %v392, 4
      %v394 = vmax.f32 %v392, %v393
      %v395 = vrot.slane %v394, 2
      %v396 = vmax.f32 %v394, %v395
      %v397 = vrot.slane %v396, 1
      %v398 = vmax.f32 %v396, %v397
      %v399 = vmax.f32 %v173, %v182
      %v400 = vmax.f32 %v399, %v191
      %v401 = vmax.f32 %v400, %v200
      %v402 = vmax.f32 %v401, %v209
      %v403 = vmax.f32 %v402, %v218
      %v404 = vmax.f32 %v403, %v227
      %v405 = vmax.f32 %v404, %v236
      %v406 = vmax.f32 %v405, %v245
      %v407 = vmax.f32 %v406, %v254
      %v408 = vmax.f32 %v407, %v263
      %v409 = vmax.f32 %v408, %v272
      %v410 = vsel %vm295, %v281, -inf
      %v411 = vmax.f32 %v409, %v410
      %v412 = vrot.slane %v411, 4
      %v413 = vmax.f32 %v411, %v412
      %v414 = vrot.slane %v413, 2
      %v415 = vmax.f32 %v413, %v414
      %v416 = vrot.slane %v415, 1
      %v417 = vmax.f32 %v415, %v416
      %v418 = vmax.f32 %v174, %v183
      %v419 = vmax.f32 %v418, %v192
      %v420 = vmax.f32 %v419, %v201
      %v421 = vmax.f32 %v420, %v210
      %v422 = vmax.f32 %v421, %v219
      %v423 = vmax.f32 %v422, %v228
      %v424 = vmax.f32 %v423, %v237
      %v425 = vmax.f32 %v424, %v246
      %v426 = vmax.f32 %v425, %v255
      %v427 = vmax.f32 %v426, %v264
      %v428 = vmax.f32 %v427, %v273
      %v429 = vsel %vm295, %v282, -inf
      %v430 = vmax.f32 %v428, %v429
      %v431 = vrot.slane %v430, 4
      %v432 = vmax.f32 %v430, %v431
      %v433 = vrot.slane %v432, 2
      %v434 = vmax.f32 %v432, %v433
      %v435 = vrot.slane %v434, 1
      %v436 = vmax.f32 %v434, %v435
      %vm437 = vcmask 531456
      %v438 = vsel %vm437, %v175, -inf
      %v439 = vsel %vm437, %v184, -inf
      %v440 = vmax.f32 %v438, %v439
      %v441 = vsel %vm437, %v193, -inf
      %v442 = vmax.f32 %v440, %v441
      %v443 = vsel %vm437, %v202, -inf
      %v444 = vmax.f32 %v442, %v443
      %v445 = vsel %vm437, %v211, -inf
      %v446 = vmax.f32 %v444, %v445
      %v447 = vsel %vm437, %v220, -inf
      %v448 = vmax.f32 %v446, %v447
      %v449 = vsel %vm437, %v229, -inf
      %v450 = vmax.f32 %v448, %v449
      %v451 = vsel %vm437, %v238, -inf
      %v452 = vmax.f32 %v450, %v451
      %v453 = vsel %vm437, %v247, -inf
      %v454 = vmax.f32 %v452, %v453
      %v455 = vsel %vm437, %v256, -inf
      %v456 = vmax.f32 %v454, %v455
      %v457 = vsel %vm437, %v265, -inf
      %v458 = vmax.f32 %v456, %v457
      %v459 = vsel %vm437, %v274, -inf
      %v460 = vmax.f32 %v458, %v459
      %vm461 = vcmask 527360
      %v462 = vsel %vm461, %v283, -inf
      %v463 = vmax.f32 %v460, %v462
      %v464 = vrot.slane %v463, 4
      %v465 = vmax.f32 %v463, %v464
      %v466 = vrot.slane %v465, 2
      %v467 = vmax.f32 %v465, %v466
      %v468 = vrot.slane %v467, 1
      %v469 = vmax.f32 %v467, %v468
      %v470 = vsub.f32 %v167, %v303
      %v471 = vsub.f32 %v168, %v322
      %v472 = vsub.f32 %v169, %v341
      %v473 = vsub.f32 %v170, %v360
      %v474 = vsub.f32 %v171, %v379
      %v475 = vsub.f32 %v172, %v398
      %v476 = vsub.f32 %v173, %v417
      %v477 = vsub.f32 %v174, %v436
      %v478 = vsub.f32 %v175, %v469
      %v479 = vsub.f32 %v176, %v303
      %v480 = vsub.f32 %v177, %v322
      %v481 = vsub.f32 %v178, %v341
      %v482 = vsub.f32 %v179, %v360
      %v483 = vsub.f32 %v180, %v379
      %v484 = vsub.f32 %v181, %v398
      %v485 = vsub.f32 %v182, %v417
      %v486 = vsub.f32 %v183, %v436
      %v487 = vsub.f32 %v184, %v469
      %v488 = vsub.f32 %v185, %v303
      %v489 = vsub.f32 %v186, %v322
      %v490 = vsub.f32 %v187, %v341
      %v491 = vsub.f32 %v188, %v360
      %v492 = vsub.f32 %v189, %v379
      %v493 = vsub.f32 %v190, %v398
      %v494 = vsub.f32 %v191, %v417
      %v495 = vsub.f32 %v192, %v436
      %v496 = vsub.f32 %v193, %v469
      %v497 = vsub.f32 %v194, %v303
      %v498 = vsub.f32 %v195, %v322
      %v499 = vsub.f32 %v196, %v341
      %v500 = vsub.f32 %v197, %v360
      %v501 = vsub.f32 %v198, %v379
      %v502 = vsub.f32 %v199, %v398
      %v503 = vsub.f32 %v200, %v417
      %v504 = vsub.f32 %v201, %v436
      %v505 = vsub.f32 %v202, %v469
      %v506 = vsub.f32 %v203, %v303
      %v507 = vsub.f32 %v204, %v322
      %v508 = vsub.f32 %v205, %v341
      %v509 = vsub.f32 %v206, %v360
      %v510 = vsub.f32 %v207, %v379
      %v511 = vsub.f32 %v208, %v398
      %v512 = vsub.f32 %v209, %v417
      %v513 = vsub.f32 %v210, %v436
      %v514 = vsub.f32 %v211, %v469
      %v515 = vsub.f32 %v212, %v303
      %v516 = vsub.f32 %v213, %v322
      %v517 = vsub.f32 %v214, %v341
      %v518 = vsub.f32 %v215, %v360
      %v519 = vsub.f32 %v216, %v379
      %v520 = vsub.f32 %v217, %v398
      %v521 = vsub.f32 %v218, %v417
      %v522 = vsub.f32 %v219, %v436
      %v523 = vsub.f32 %v220, %v469
      %v524 = vsub.f32 %v221, %v303
      %v525 = vsub.f32 %v222, %v322
      %v526 = vsub.f32 %v223, %v341
      %v527 = vsub.f32 %v224, %v360
      %v528 = vsub.f32 %v225, %v379
      %v529 = vsub.f32 %v226, %v398
      %v530 = vsub.f32 %v227, %v417
      %v531 = vsub.f32 %v228, %v436
      %v532 = vsub.f32 %v229, %v469
      %v533 = vsub.f32 %v230, %v303
      %v534 = vsub.f32 %v231, %v322
      %v535 = vsub.f32 %v232, %v341
      %v536 = vsub.f32 %v233, %v360
      %v537 = vsub.f32 %v234, %v379
      %v538 = vsub.f32 %v235, %v398
      %v539 = vsub.f32 %v236, %v417
      %v540 = vsub.f32 %v237, %v436
      %v541 = vsub.f32 %v238, %v469
      %v542 = vsub.f32 %v239, %v303
      %v543 = vsub.f32 %v240, %v322
      %v544 = vsub.f32 %v241, %v341
      %v545 = vsub.f32 %v242, %v360
      %v546 = vsub.f32 %v243, %v379
      %v547 = vsub.f32 %v244, %v398
      %v548 = vsub.f32 %v245, %v417
      %v549 = vsub.f32 %v246, %v436
      %v550 = vsub.f32 %v247, %v469
      %v551 = vsub.f32 %v248, %v303
      %v552 = vsub.f32 %v249, %v322
      %v553 = vsub.f32 %v250, %v341
      %v554 = vsub.f32 %v251, %v360
      %v555 = vsub.f32 %v252, %v379
      %v556 = vsub.f32 %v253, %v398
      %v557 = vsub.f32 %v254, %v417
      %v558 = vsub.f32 %v255, %v436
      %v559 = vsub.f32 %v256, %v469
      %v560 = vsub.f32 %v257, %v303
      %v561 = vsub.f32 %v258, %v322
      %v562 = vsub.f32 %v259, %v341
      %v563 = vsub.f32 %v260, %v360
      %v564 = vsub.f32 %v261, %v379
      %v565 = vsub.f32 %v262, %v398
      %v566 = vsub.f32 %v263, %v417
      %v567 = vsub.f32 %v264, %v436
      %v568 = vsub.f32 %v265, %v469
      %v569 = vsub.f32 %v266, %v303
      %v570 = vsub.f32 %v267, %v322
      %v571 = vsub.f32 %v268, %v341
      %v572 = vsub.f32 %v269, %v360
      %v573 = vsub.f32 %v270, %v379
      %v574 = vsub.f32 %v271, %v398
      %v575 = vsub.f32 %v272, %v417
      %v576 = vsub.f32 %v273, %v436
      %v577 = vsub.f32 %v274, %v469
      %v578 = vsub.f32 %v275, %v303
      %v579 = vsub.f32 %v276, %v322
      %v580 = vsub.f32 %v277, %v341
      %v581 = vsub.f32 %v278, %v360
      %v582 = vsub.f32 %v279, %v379
      %v583 = vsub.f32 %v280, %v398
      %v584 = vsub.f32 %v281, %v417
      %v585 = vsub.f32 %v282, %v436
      %v586 = vsub.f32 %v283, %v469
      %v587 = vmul.f32 %v470, 1.442695
      %v588 = vpow.pop %v587
      %v589 = vmul.f32 %v471, 1.442695
      %v590 = vpow.pop %v589
      %v591 = vmul.f32 %v472, 1.442695
      %v592 = vpow.pop %v591
      %v593 = vmul.f32 %v473, 1.442695
      %v594 = vpow.pop %v593
      %v595 = vmul.f32 %v474, 1.442695
      %v596 = vpow.pop %v595
      %v597 = vmul.f32 %v475, 1.442695
      %v598 = vpow.pop %v597
      %v599 = vmul.f32 %v476, 1.442695
      %v600 = vpow.pop %v599
      %v601 = vmul.f32 %v477, 1.442695
      %v602 = vpow.pop %v601
      %v603 = vmul.f32 %v478, 1.442695
      %v604 = vpow.pop %v603
      %v605 = vmul.f32 %v479, 1.442695
      %v606 = vpow.pop %v605
      %v607 = vmul.f32 %v480, 1.442695
      %v608 = vpow.pop %v607
      %v609 = vmul.f32 %v481, 1.442695
      %v610 = vpow.pop %v609
      %v611 = vmul.f32 %v482, 1.442695
      %v612 = vpow.pop %v611
      %v613 = vmul.f32 %v483, 1.442695
      %v614 = vpow.pop %v613
      %v615 = vmul.f32 %v484, 1.442695
      %v616 = vpow.pop %v615
      %v617 = vmul.f32 %v485, 1.442695
      %v618 = vpow.pop %v617
      %v619 = vmul.f32 %v486, 1.442695
      %v620 = vpow.pop %v619
      %v621 = vmul.f32 %v487, 1.442695
      %v622 = vpow.pop %v621
      %v623 = vmul.f32 %v488, 1.442695
      %v624 = vpow.pop %v623
      %v625 = vmul.f32 %v489, 1.442695
      %v626 = vpow.pop %v625
      %v627 = vmul.f32 %v490, 1.442695
      %v628 = vpow.pop %v627
      %v629 = vmul.f32 %v491, 1.442695
      %v630 = vpow.pop %v629
      %v631 = vmul.f32 %v492, 1.442695
      %v632 = vpow.pop %v631
      %v633 = vmul.f32 %v493, 1.442695
      %v634 = vpow.pop %v633
      %v635 = vmul.f32 %v494, 1.442695
      %v636 = vpow.pop %v635
      %v637 = vmul.f32 %v495, 1.442695
      %v638 = vpow.pop %v637
      %v639 = vmul.f32 %v496, 1.442695
      %v640 = vpow.pop %v639
      %v641 = vmul.f32 %v497, 1.442695
      %v642 = vpow.pop %v641
      %v643 = vmul.f32 %v498, 1.442695
      %v644 = vpow.pop %v643
      %v645 = vmul.f32 %v499, 1.442695
      %v646 = vpow.pop %v645
      %v647 = vmul.f32 %v500, 1.442695
      %v648 = vpow.pop %v647
      %v649 = vmul.f32 %v501, 1.442695
      %v650 = vpow.pop %v649
      %v651 = vmul.f32 %v502, 1.442695
      %v652 = vpow.pop %v651
      %v653 = vmul.f32 %v503, 1.442695
      %v654 = vpow.pop %v653
      %v655 = vmul.f32 %v504, 1.442695
      %v656 = vpow.pop %v655
      %v657 = vmul.f32 %v505, 1.442695
      %v658 = vpow.pop %v657
      %v659 = vmul.f32 %v506, 1.442695
      %v660 = vpow.pop %v659
      %v661 = vmul.f32 %v507, 1.442695
      %v662 = vpow.pop %v661
      %v663 = vmul.f32 %v508, 1.442695
      %v664 = vpow.pop %v663
      %v665 = vmul.f32 %v509, 1.442695
      %v666 = vpow.pop %v665
      %v667 = vmul.f32 %v510, 1.442695
      %v668 = vpow.pop %v667
      %v669 = vmul.f32 %v511, 1.442695
      %v670 = vpow.pop %v669
      %v671 = vmul.f32 %v512, 1.442695
      %v672 = vpow.pop %v671
      %v673 = vmul.f32 %v513, 1.442695
      %v674 = vpow.pop %v673
      %v675 = vmul.f32 %v514, 1.442695
      %v676 = vpow.pop %v675
      %v677 = vmul.f32 %v515, 1.442695
      %v678 = vpow.pop %v677
      %v679 = vmul.f32 %v516, 1.442695
      %v680 = vpow.pop %v679
      %v681 = vmul.f32 %v517, 1.442695
      %v682 = vpow.pop %v681
      %v683 = vmul.f32 %v518, 1.442695
      %v684 = vpow.pop %v683
      %v685 = vmul.f32 %v519, 1.442695
      %v686 = vpow.pop %v685
      %v687 = vmul.f32 %v520, 1.442695
      %v688 = vpow.pop %v687
      %v689 = vmul.f32 %v521, 1.442695
      %v690 = vpow.pop %v689
      %v691 = vmul.f32 %v522, 1.442695
      %v692 = vpow.pop %v691
      %v693 = vmul.f32 %v523, 1.442695
      %v694 = vpow.pop %v693
      %v695 = vmul.f32 %v524, 1.442695
      %v696 = vpow.pop %v695
      %v697 = vmul.f32 %v525, 1.442695
      %v698 = vpow.pop %v697
      %v699 = vmul.f32 %v526, 1.442695
      %v700 = vpow.pop %v699
      %v701 = vmul.f32 %v527, 1.442695
      %v702 = vpow.pop %v701
      %v703 = vmul.f32 %v528, 1.442695
      %v704 = vpow.pop %v703
      %v705 = vmul.f32 %v529, 1.442695
      %v706 = vpow.pop %v705
      %v707 = vmul.f32 %v530, 1.442695
      %v708 = vpow.pop %v707
      %v709 = vmul.f32 %v531, 1.442695
      %v710 = vpow.pop %v709
      %v711 = vmul.f32 %v532, 1.442695
      %v712 = vpow.pop %v711
      %v713 = vmul.f32 %v533, 1.442695
      %v714 = vpow.pop %v713
      %v715 = vmul.f32 %v534, 1.442695
      %v716 = vpow.pop %v715
      %v717 = vmul.f32 %v535, 1.442695
      %v718 = vpow.pop %v717
      %v719 = vmul.f32 %v536, 1.442695
      %v720 = vpow.pop %v719
      %v721 = vmul.f32 %v537, 1.442695
      %v722 = vpow.pop %v721
      %v723 = vmul.f32 %v538, 1.442695
      %v724 = vpow.pop %v723
      %v725 = vmul.f32 %v539, 1.442695
      %v726 = vpow.pop %v725
      %v727 = vmul.f32 %v540, 1.442695
      %v728 = vpow.pop %v727
      %v729 = vmul.f32 %v541, 1.442695
      %v730 = vpow.pop %v729
      %v731 = vmul.f32 %v542, 1.442695
      %v732 = vpow.pop %v731
      %v733 = vmul.f32 %v543, 1.442695
      %v734 = vpow.pop %v733
      %v735 = vmul.f32 %v544, 1.442695
      %v736 = vpow.pop %v735
      %v737 = vmul.f32 %v545, 1.442695
      %v738 = vpow.pop %v737
      %v739 = vmul.f32 %v546, 1.442695
      %v740 = vpow.pop %v739
      %v741 = vmul.f32 %v547, 1.442695
      %v742 = vpow.pop %v741
      %v743 = vmul.f32 %v548, 1.442695
      %v744 = vpow.pop %v743
      %v745 = vmul.f32 %v549, 1.442695
      %v746 = vpow.pop %v745
      %v747 = vmul.f32 %v550, 1.442695
      %v748 = vpow.pop %v747
      %v749 = vmul.f32 %v551, 1.442695
      %v750 = vpow.pop %v749
      %v751 = vmul.f32 %v552, 1.442695
      %v752 = vpow.pop %v751
      %v753 = vmul.f32 %v553, 1.442695
      %v754 = vpow.pop %v753
      %v755 = vmul.f32 %v554, 1.442695
      %v756 = vpow.pop %v755
      %v757 = vmul.f32 %v555, 1.442695
      %v758 = vpow.pop %v757
      %v759 = vmul.f32 %v556, 1.442695
      %v760 = vpow.pop %v759
      %v761 = vmul.f32 %v557, 1.442695
      %v762 = vpow.pop %v761
      %v763 = vmul.f32 %v558, 1.442695
      %v764 = vpow.pop %v763
      %v765 = vmul.f32 %v559, 1.442695
      %v766 = vpow.pop %v765
      %v767 = vmul.f32 %v560, 1.442695
      %v768 = vpow.pop %v767
      %v769 = vmul.f32 %v561, 1.442695
      %v770 = vpow.pop %v769
      %v771 = vmul.f32 %v562, 1.442695
      %v772 = vpow.pop %v771
      %v773 = vmul.f32 %v563, 1.442695
      %v774 = vpow.pop %v773
      %v775 = vmul.f32 %v564, 1.442695
      %v776 = vpow.pop %v775
      %v777 = vmul.f32 %v565, 1.442695
      %v778 = vpow.pop %v777
      %v779 = vmul.f32 %v566, 1.442695
      %v780 = vpow.pop %v779
      %v781 = vmul.f32 %v567, 1.442695
      %v782 = vpow.pop %v781
      %v783 = vmul.f32 %v568, 1.442695
      %v784 = vpow.pop %v783
      %v785 = vmul.f32 %v569, 1.442695
      %v786 = vpow.pop %v785
      %v787 = vmul.f32 %v570, 1.442695
      %v788 = vpow.pop %v787
      %v789 = vmul.f32 %v571, 1.442695
      %v790 = vpow.pop %v789
      %v791 = vmul.f32 %v572, 1.442695
      %v792 = vpow.pop %v791
      %v793 = vmul.f32 %v573, 1.442695
      %v794 = vpow.pop %v793
      %v795 = vmul.f32 %v574, 1.442695
      %v796 = vpow.pop %v795
      %v797 = vmul.f32 %v575, 1.442695
      %v798 = vpow.pop %v797
      %v799 = vmul.f32 %v576, 1.442695
      %v800 = vpow.pop %v799
      %v801 = vmul.f32 %v577, 1.442695
      %v802 = vpow.pop %v801
      %v803 = vmul.f32 %v578, 1.442695
      %v804 = vpow.pop %v803
      %v805 = vmul.f32 %v579, 1.442695
      %v806 = vpow.pop %v805
      %v807 = vmul.f32 %v580, 1.442695
      %v808 = vpow.pop %v807
      %v809 = vmul.f32 %v581, 1.442695
      %v810 = vpow.pop %v809
      %v811 = vmul.f32 %v582, 1.442695
      %v812 = vpow.pop %v811
      %v813 = vmul.f32 %v583, 1.442695
      %v814 = vpow.pop %v813
      %v815 = vmul.f32 %v584, 1.442695
      %v816 = vpow.pop %v815
      %v817 = vmul.f32 %v585, 1.442695
      %v818 = vpow.pop %v817
      %v819 = vmul.f32 %v586, 1.442695
      %v820 = vpow.pop %v819
      %v821 = vadd.f32 %v588, %v606
      %v822 = vadd.f32 %v821, %v624
      %v823 = vadd.f32 %v822, %v642
      %v824 = vadd.f32 %v823, %v660
      %v825 = vadd.f32 %v824, %v678
      %v826 = vadd.f32 %v825, %v696
      %v827 = vadd.f32 %v826, %v714
      %v828 = vadd.f32 %v827, %v732
      %v829 = vadd.f32 %v828, %v750
      %v830 = vadd.f32 %v829, %v768
      %v831 = vadd.f32 %v830, %v786
      %v832 = vsel %vm295, %v804, 0.0
      %v833 = vadd.f32 %v831, %v832
      %v834 = vrot.slane %v833, 4
      %v835 = vadd.f32 %v833, %v834
      %v836 = vrot.slane %v835, 2
      %v837 = vadd.f32 %v835, %v836
      %v838 = vrot.slane %v837, 1
      %v839 = vadd.f32 %v837, %v838
      %v840 = vadd.f32 %v590, %v608
      %v841 = vadd.f32 %v840, %v626
      %v842 = vadd.f32 %v841, %v644
      %v843 = vadd.f32 %v842, %v662
      %v844 = vadd.f32 %v843, %v680
      %v845 = vadd.f32 %v844, %v698
      %v846 = vadd.f32 %v845, %v716
      %v847 = vadd.f32 %v846, %v734
      %v848 = vadd.f32 %v847, %v752
      %v849 = vadd.f32 %v848, %v770
      %v850 = vadd.f32 %v849, %v788
      %v851 = vsel %vm295, %v806, 0.0
      %v852 = vadd.f32 %v850, %v851
      %v853 = vrot.slane %v852, 4
      %v854 = vadd.f32 %v852, %v853
      %v855 = vrot.slane %v854, 2
      %v856 = vadd.f32 %v854, %v855
      %v857 = vrot.slane %v856, 1
      %v858 = vadd.f32 %v856, %v857
      %v859 = vadd.f32 %v592, %v610
      %v860 = vadd.f32 %v859, %v628
      %v861 = vadd.f32 %v860, %v646
      %v862 = vadd.f32 %v861, %v664
      %v863 = vadd.f32 %v862, %v682
      %v864 = vadd.f32 %v863, %v700
      %v865 = vadd.f32 %v864, %v718
      %v866 = vadd.f32 %v865, %v736
      %v867 = vadd.f32 %v866, %v754
      %v868 = vadd.f32 %v867, %v772
      %v869 = vadd.f32 %v868, %v790
      %v870 = vsel %vm295, %v808, 0.0
      %v871 = vadd.f32 %v869, %v870
      %v872 = vrot.slane %v871, 4
      %v873 = vadd.f32 %v871, %v872
      %v874 = vrot.slane %v873, 2
      %v875 = vadd.f32 %v873, %v874
      %v876 = vrot.slane %v875, 1
      %v877 = vadd.f32 %v875, %v876
      %v878 = vadd.f32 %v594, %v612
      %v879 = vadd.f32 %v878, %v630
      %v880 = vadd.f32 %v879, %v648
      %v881 = vadd.f32 %v880, %v666
      %v882 = vadd.f32 %v881, %v684
      %v883 = vadd.f32 %v882, %v702
      %v884 = vadd.f32 %v883, %v720
      %v885 = vadd.f32 %v884, %v738
      %v886 = vadd.f32 %v885, %v756
      %v887 = vadd.f32 %v886, %v774
      %v888 = vadd.f32 %v887, %v792
      %v889 = vsel %vm295, %v810, 0.0
      %v890 = vadd.f32 %v888, %v889
      %v891 = vrot.slane %v890, 4
      %v892 = vadd.f32 %v890, %v891
      %v893 = vrot.slane %v892, 2
      %v894 = vadd.f32 %v892, %v893
      %v895 = vrot.slane %v894, 1
      %v896 = vadd.f32 %v894, %v895
      %v897 = vadd.f32 %v596, %v614
      %v898 = vadd.f32 %v897, %v632
      %v899 = vadd.f32 %v898, %v650
      %v900 = vadd.f32 %v899, %v668
      %v901 = vadd.f32 %v900, %v686
      %v902 = vadd.f32 %v901, %v704
      %v903 = vadd.f32 %v902, %v722
      %v904 = vadd.f32 %v903, %v740
      %v905 = vadd.f32 %v904, %v758
      %v906 = vadd.f32 %v905, %v776
      %v907 = vadd.f32 %v906, %v794
      %v908 = vsel %vm295, %v812, 0.0
      %v909 = vadd.f32 %v907, %v908
      %v910 = vrot.slane %v909, 4
      %v911 = vadd.f32 %v909, %v910
      %v912 = vrot.slane %v911, 2
      %v913 = vadd.f32 %v911, %v912
      %v914 = vrot.slane %v913, 1
      %v915 = vadd.f32 %v913, %v914
      %v916 = vadd.f32 %v598, %v616
      %v917 = vadd.f32 %v916, %v634
      %v918 = vadd.f32 %v917, %v652
      %v919 = vadd.f32 %v918, %v670
      %v920 = vadd.f32 %v919, %v688
      %v921 = vadd.f32 %v920, %v706
      %v922 = vadd.f32 %v921, %v724
      %v923 = vadd.f32 %v922, %v742
      %v924 = vadd.f32 %v923, %v760
      %v925 = vadd.f32 %v924, %v778
      %v926 = vadd.f32 %v925, %v796
      %v927 = vsel %vm295, %v814, 0.0
      %v928 = vadd.f32 %v926, %v927
      %v929 = vrot.slane %v928, 4
      %v930 = vadd.f32 %v928, %v929
      %v931 = vrot.slane %v930, 2
      %v932 = vadd.f32 %v930, %v931
      %v933 = vrot.slane %v932, 1
      %v934 = vadd.f32 %v932, %v933
      %v935 = vadd.f32 %v600, %v618
      %v936 = vadd.f32 %v935, %v636
      %v937 = vadd.f32 %v936, %v654
      %v938 = vadd.f32 %v937, %v672
      %v939 = vadd.f32 %v938, %v690
      %v940 = vadd.f32 %v939, %v708
      %v941 = vadd.f32 %v940, %v726
      %v942 = vadd.f32 %v941, %v744
      %v943 = vadd.f32 %v942, %v762
      %v944 = vadd.f32 %v943, %v780
      %v945 = vadd.f32 %v944, %v798
      %v946 = vsel %vm295, %v816, 0.0
      %v947 = vadd.f32 %v945, %v946
      %v948 = vrot.slane %v947, 4
      %v949 = vadd.f32 %v947, %v948
      %v950 = vrot.slane %v949, 2
      %v951 = vadd.f32 %v949, %v950
      %v952 = vrot.slane %v951, 1
      %v953 = vadd.f32 %v951, %v952
      %v954 = vadd.f32 %v602, %v620
      %v955 = vadd.f32 %v954, %v638
      %v956 = vadd.f32 %v955, %v656
      %v957 = vadd.f32 %v956, %v674
      %v958 = vadd.f32 %v957, %v692
      %v959 = vadd.f32 %v958, %v710
      %v960 = vadd.f32 %v959, %v728
      %v961 = vadd.f32 %v960, %v746
      %v962 = vadd.f32 %v961, %v764
      %v963 = vadd.f32 %v962, %v782
      %v964 = vadd.f32 %v963, %v800
      %v965 = vsel %vm295, %v818, 0.0
      %v966 = vadd.f32 %v964, %v965
      %v967 = vrot.slane %v966, 4
      %v968 = vadd.f32 %v966, %v967
      %v969 = vrot.slane %v968, 2
      %v970 = vadd.f32 %v968, %v969
      %v971 = vrot.slane %v970, 1
      %v972 = vadd.f32 %v970, %v971
      %v973 = vsel %vm437, %v604, 0.0
      %v974 = vsel %vm437, %v622, 0.0
      %v975 = vadd.f32 %v973, %v974
      %v976 = vsel %vm437, %v640, 0.0
      %v977 = vadd.f32 %v975, %v976
      %v978 = vsel %vm437, %v658, 0.0
      %v979 = vadd.f32 %v977, %v978
      %v980 = vsel %vm437, %v676, 0.0
      %v981 = vadd.f32 %v979, %v980
      %v982 = vsel %vm437, %v694, 0.0
      %v983 = vadd.f32 %v981, %v982
      %v984 = vsel %vm437, %v712, 0.0
      %v985 = vadd.f32 %v983, %v984
      %v986 = vsel %vm437, %v730, 0.0
      %v987 = vadd.f32 %v985, %v986
      %v988 = vsel %vm437, %v748, 0.0
      %v989 = vadd.f32 %v987, %v988
      %v990 = vsel %vm437, %v766, 0.0
      %v991 = vadd.f32 %v989, %v990
      %v992 = vsel %vm437, %v784, 0.0
      %v993 = vadd.f32 %v991, %v992
      %v994 = vsel %vm437, %v802, 0.0
      %v995 = vadd.f32 %v993, %v994
      %v996 = vsel %vm461, %v820, 0.0
      %v997 = vadd.f32 %v995, %v996
      %v998 = vrot.slane %v997, 4
      %v999 = vadd.f32 %v997, %v998
      %v1000 = vrot.slane %v999, 2
      %v1001 = vadd.f32 %v999, %v1000
      %v1002 = vrot.slane %v1001, 1
      %v1003 = vadd.f32 %v1001, %v1002
      %v1004 = vrcp.pop %v839
      %v1005 = vmul.f32 %v588, %v1004
      %v1006 = vrcp.pop %v858
      %v1007 = vmul.f32 %v590, %v1006
      %v1008 = vrcp.pop %v877
      %v1009 = vmul.f32 %v592, %v1008
      %v1010 = vrcp.pop %v896
      %v1011 = vmul.f32 %v594, %v1010
      %v1012 = vrcp.pop %v915
      %v1013 = vmul.f32 %v596, %v1012
      %v1014 = vrcp.pop %v934
      %v1015 = vmul.f32 %v598, %v1014
      %v1016 = vrcp.pop %v953
      %v1017 = vmul.f32 %v600, %v1016
      %v1018 = vrcp.pop %v972
      %v1019 = vmul.f32 %v602, %v1018
      %v1020 = vrcp.pop %v1003
      %v1021 = vmul.f32 %v604, %v1020
      %v1022 = vmul.f32 %v606, %v1004
      %v1023 = vmul.f32 %v608, %v1006
      %v1024 = vmul.f32 %v610, %v1008
      %v1025 = vmul.f32 %v612, %v1010
      %v1026 = vmul.f32 %v614, %v1012
      %v1027 = vmul.f32 %v616, %v1014
      %v1028 = vmul.f32 %v618, %v1016
      %v1029 = vmul.f32 %v620, %v1018
      %v1030 = vmul.f32 %v622, %v1020
      %v1031 = vmul.f32 %v624, %v1004
      %v1032 = vmul.f32 %v626, %v1006
      %v1033 = vmul.f32 %v628, %v1008
      %v1034 = vmul.f32 %v630, %v1010
      %v1035 = vmul.f32 %v632, %v1012
      %v1036 = vmul.f32 %v634, %v1014
      %v1037 = vmul.f32 %v636, %v1016
      %v1038 = vmul.f32 %v638, %v1018
      %v1039 = vmul.f32 %v640, %v1020
      %v1040 = vmul.f32 %v642, %v1004
      %v1041 = vmul.f32 %v644, %v1006
      %v1042 = vmul.f32 %v646, %v1008
      %v1043 = vmul.f32 %v648, %v1010
      %v1044 = vmul.f32 %v650, %v1012
      %v1045 = vmul.f32 %v652, %v1014
      %v1046 = vmul.f32 %v654, %v1016
      %v1047 = vmul.f32 %v656, %v1018
      %v1048 = vmul.f32 %v658, %v1020
      %v1049 = vmul.f32 %v660, %v1004
      %v1050 = vmul.f32 %v662, %v1006
      %v1051 = vmul.f32 %v664, %v1008
      %v1052 = vmul.f32 %v666, %v1010
      %v1053 = vmul.f32 %v668, %v1012
      %v1054 = vmul.f32 %v670, %v1014
      %v1055 = vmul.f32 %v672, %v1016
      %v1056 = vmul.f32 %v674, %v1018
      %v1057 = vmul.f32 %v676, %v1020
      %v1058 = vmul.f32 %v678, %v1004
      %v1059 = vmul.f32 %v680, %v1006
      %v1060 = vmul.f32 %v682, %v1008
      %v1061 = vmul.f32 %v684, %v1010
      %v1062 = vmul.f32 %v686, %v1012
      %v1063 = vmul.f32 %v688, %v1014
      %v1064 = vmul.f32 %v690, %v1016
      %v1065 = vmul.f32 %v692, %v1018
      %v1066 = vmul.f32 %v694, %v1020
      %v1067 = vmul.f32 %v696, %v1004
      %v1068 = vmul.f32 %v698, %v1006
      %v1069 = vmul.f32 %v700, %v1008
      %v1070 = vmul.f32 %v702, %v1010
      %v1071 = vmul.f32 %v704, %v1012
      %v1072 = vmul.f32 %v706, %v1014
      %v1073 = vmul.f32 %v708, %v1016
      %v1074 = vmul.f32 %v710, %v1018
      %v1075 = vmul.f32 %v712, %v1020
      %v1076 = vmul.f32 %v714, %v1004
      %v1077 = vmul.f32 %v716, %v1006
      %v1078 = vmul.f32 %v718, %v1008
      %v1079 = vmul.f32 %v720, %v1010
      %v1080 = vmul.f32 %v722, %v1012
      %v1081 = vmul.f32 %v724, %v1014
      %v1082 = vmul.f32 %v726, %v1016
      %v1083 = vmul.f32 %v728, %v1018
      %v1084 = vmul.f32 %v730, %v1020
      %v1085 = vmul.f32 %v732, %v1004
      %v1086 = vmul.f32 %v734, %v1006
      %v1087 = vmul.f32 %v736, %v1008
      %v1088 = vmul.f32 %v738, %v1010
      %v1089 = vmul.f32 %v740, %v1012
      %v1090 = vmul.f32 %v742, %v1014
      %v1091 = vmul.f32 %v744, %v1016
      %v1092 = vmul.f32 %v746, %v1018
      %v1093 = vmul.f32 %v748, %v1020
      %v1094 = vmul.f32 %v750, %v1004
      %v1095 = vmul.f32 %v752, %v1006
      %v1096 = vmul.f32 %v754, %v1008
      %v1097 = vmul.f32 %v756, %v1010
      %v1098 = vmul.f32 %v758, %v1012
      %v1099 = vmul.f32 %v760, %v1014
      %v1100 = vmul.f32 %v762, %v1016
      %v1101 = vmul.f32 %v764, %v1018
      %v1102 = vmul.f32 %v766, %v1020
      %v1103 = vmul.f32 %v768, %v1004
      %v1104 = vmul.f32 %v770, %v1006
      %v1105 = vmul.f32 %v772, %v1008
      %v1106 = vmul.f32 %v774, %v1010
      %v1107 = vmul.f32 %v776, %v1012
      %v1108 = vmul.f32 %v778, %v1014
      %v1109 = vmul.f32 %v780, %v1016
      %v1110 = vmul.f32 %v782, %v1018
      %v1111 = vmul.f32 %v784, %v1020
      %v1112 = vmul.f32 %v786, %v1004
      %v1113 = vmul.f32 %v788, %v1006
      %v1114 = vmul.f32 %v790, %v1008
      %v1115 = vmul.f32 %v792, %v1010
      %v1116 = vmul.f32 %v794, %v1012
      %v1117 = vmul.f32 %v796, %v1014
      %v1118 = vmul.f32 %v798, %v1016
      %v1119 = vmul.f32 %v800, %v1018
      %v1120 = vmul.f32 %v802, %v1020
      %v1121 = vmul.f32 %v804, %v1004
      %v1122 = vmul.f32 %v806, %v1006
      %v1123 = vmul.f32 %v808, %v1008
      %v1124 = vmul.f32 %v810, %v1010
      %v1125 = vmul.f32 %v812, %v1012
      %v1126 = vmul.f32 %v814, %v1014
      %v1127 = vmul.f32 %v816, %v1016
      %v1128 = vmul.f32 %v818, %v1018
      %v1129 = vmul.f32 %v820, %v1020
      %v1130 = vlaneseq
      %v1131 = vand.u32 %v1130, 127
      %v1132 = vld [vmem:[%s2] sm:$0x1]
      %v1133 = vld [vmem:[%s1] sm:$0xff]
      %v1134 = vld [vmem:[%s1 + $0x8] sm:$0xff]
      %v1135 = vld [vmem:[%s1 + $0x10] sm:$0xff]
      %v1136 = vld [vmem:[%s1 + $0x18] sm:$0xff]
      %v1137 = vld [vmem:[%s1 + $0x20] sm:$0xff]
      %v1138 = vld [vmem:[%s1 + $0x28] sm:$0xff]
      %v1139 = vld [vmem:[%s1 + $0x30] sm:$0xff]
      %v1140 = vld [vmem:[%s1 + $0x38] sm:$0xff]
      %v1141 = vld [vmem:[%s1 + $0x40] sm:$0xff]
      %v1142 = vld [vmem:[%s1 + $0x48] sm:$0xff]
      %v1143 = vld [vmem:[%s1 + $0x50] sm:$0xff]
      %v1144 = vld [vmem:[%s1 + $0x58] sm:$0xff]
      %v1145 = vld [vmem:[%s1 + $0x60] sm:$0xff]
      %v1146 = vld [vmem:[%s1 + $0x68] sm:$0xff]
      %v1147 = vld [vmem:[%s1 + $0x70] sm:$0xff]
      %v1148 = vld [vmem:[%s1 + $0x78] sm:$0xff]
      %v1149 = vld [vmem:[%s1 + $0x80] sm:$0xff]
      %v1150 = vld [vmem:[%s1 + $0x88] sm:$0xff]
      %v1151 = vld [vmem:[%s1 + $0x90] sm:$0xff]
      %v1152 = vld [vmem:[%s1 + $0x98] sm:$0xff]
      %v1153 = vld [vmem:[%s1 + $0xa0] sm:$0xff]
      %v1154 = vld [vmem:[%s1 + $0xa8] sm:$0xff]
      %v1155 = vld [vmem:[%s1 + $0xb0] sm:$0xff]
      %v1156 = vld [vmem:[%s1 + $0xb8] sm:$0xff]
      %v1157 = vld [vmem:[%s1 + $0xc0] sm:$0xff]
      %v1158 = vld [vmem:[%s1 + $0xc8] sm:$0xff]
      %v1159 = vld [vmem:[%s1 + $0xd0] sm:$0xff]
      %v1160 = vld [vmem:[%s1 + $0xd8] sm:$0xff]
      %v1161 = vld [vmem:[%s1 + $0xe0] sm:$0xff]
      %v1162 = vld [vmem:[%s1 + $0xe8] sm:$0xff]
      %v1163 = vld [vmem:[%s1 + $0xf0] sm:$0xff]
      %v1164 = vld [vmem:[%s1 + $0xf8] sm:$0xff]
      %v1165 = vld [vmem:[%s1 + $0x100] sm:$0xff]
      %v1166 = vld [vmem:[%s1 + $0x108] sm:$0xff]
      %v1167 = vld [vmem:[%s1 + $0x110] sm:$0xff]
      %v1168 = vld [vmem:[%s1 + $0x118] sm:$0xff]
      %v1169 = vld [vmem:[%s1 + $0x120] sm:$0xff]
      %v1170 = vld [vmem:[%s1 + $0x128] sm:$0xff]
      %v1171 = vld [vmem:[%s1 + $0x130] sm:$0xff]
      %v1172 = vld [vmem:[%s1 + $0x138] sm:$0xff]
      %v1173 = vld [vmem:[%s1 + $0x140] sm:$0xff]
      %v1174 = vld [vmem:[%s1 + $0x148] sm:$0xff]
      %v1175 = vld [vmem:[%s1 + $0x150] sm:$0xff]
      %v1176 = vld [vmem:[%s1 + $0x158] sm:$0xff]
      %v1177 = vld [vmem:[%s1 + $0x160] sm:$0xff]
      %v1178 = vld [vmem:[%s1 + $0x168] sm:$0xff]
      %v1179 = vld [vmem:[%s1 + $0x170] sm:$0xff]
      %v1180 = vld [vmem:[%s1 + $0x178] sm:$0xff]
      %v1181 = vld [vmem:[%s1 + $0x180] sm:$0xff]
      %v1182 = vld [vmem:[%s1 + $0x188] sm:$0xff]
      %v1183 = vld [vmem:[%s1 + $0x190] sm:$0xff]
      %v1184 = vld [vmem:[%s1 + $0x198] sm:$0xff]
      %v1185 = vld [vmem:[%s1 + $0x1a0] sm:$0xff]
      %v1186 = vld [vmem:[%s1 + $0x1a8] sm:$0xff]
      %v1187 = vld [vmem:[%s1 + $0x1b0] sm:$0xff]
      %v1188 = vld [vmem:[%s1 + $0x1b8] sm:$0xff]
      %v1189 = vld [vmem:[%s1 + $0x1c0] sm:$0xff]
      %v1190 = vld [vmem:[%s1 + $0x1c8] sm:$0xff]
      %v1191 = vld [vmem:[%s1 + $0x1d0] sm:$0xff]
      %v1192 = vld [vmem:[%s1 + $0x1d8] sm:$0xff]
      %v1193 = vld [vmem:[%s1 + $0x1e0] sm:$0xff]
      %v1194 = vld [vmem:[%s1 + $0x1e8] sm:$0xff]
      %v1195 = vld [vmem:[%s1 + $0x1f0] sm:$0xff]
      %v1196 = vld [vmem:[%s1 + $0x1f8] sm:$0xff]
      %v1197 = vld [vmem:[%s1 + $0x200] sm:$0xff]
      %v1198 = vld [vmem:[%s1 + $0x208] sm:$0xff]
      %v1199 = vld [vmem:[%s1 + $0x210] sm:$0xff]
      %v1200 = vld [vmem:[%s1 + $0x218] sm:$0xff]
      %v1201 = vld [vmem:[%s1 + $0x220] sm:$0xff]
      %v1202 = vld [vmem:[%s1 + $0x228] sm:$0xff]
      %v1203 = vld [vmem:[%s1 + $0x230] sm:$0xff]
      %v1204 = vld [vmem:[%s1 + $0x238] sm:$0xff]
      %v1205 = vld [vmem:[%s1 + $0x240] sm:$0xff]
      %v1206 = vld [vmem:[%s1 + $0x248] sm:$0xff]
      %v1207 = vld [vmem:[%s1 + $0x250] sm:$0xff]
      %v1208 = vld [vmem:[%s1 + $0x258] sm:$0xff]
      %v1209 = vld [vmem:[%s1 + $0x260] sm:$0xff]
      %v1210 = vld [vmem:[%s1 + $0x268] sm:$0xff]
      %v1211 = vld [vmem:[%s1 + $0x270] sm:$0xff]
      %v1212 = vld [vmem:[%s1 + $0x278] sm:$0xff]
      %v1213 = vld [vmem:[%s1 + $0x280] sm:$0xff]
      %v1214 = vld [vmem:[%s1 + $0x288] sm:$0xff]
      %v1215 = vld [vmem:[%s1 + $0x290] sm:$0xff]
      %v1216 = vld [vmem:[%s1 + $0x298] sm:$0xff]
      %v1217 = vld [vmem:[%s1 + $0x2a0] sm:$0xff]
      %v1218 = vld [vmem:[%s1 + $0x2a8] sm:$0xff]
      %v1219 = vld [vmem:[%s1 + $0x2b0] sm:$0xff]
      %v1220 = vld [vmem:[%s1 + $0x2b8] sm:$0xff]
      %v1221 = vld [vmem:[%s1 + $0x2c0] sm:$0xff]
      %v1222 = vld [vmem:[%s1 + $0x2c8] sm:$0xff]
      %v1223 = vld [vmem:[%s1 + $0x2d0] sm:$0xff]
      %v1224 = vld [vmem:[%s1 + $0x2d8] sm:$0xff]
      %v1225 = vld [vmem:[%s1 + $0x2e0] sm:$0xff]
      %v1226 = vld [vmem:[%s1 + $0x2e8] sm:$0xff]
      %v1227 = vld [vmem:[%s1 + $0x2f0] sm:$0xff]
      %v1228 = vld [vmem:[%s1 + $0x2f8] sm:$0xff]
      %v1229 = vld [vmem:[%s1 + $0x300] sm:$0xff]
      %v1230 = vld [vmem:[%s1 + $0x308] sm:$0xff]
      %v1231 = vld [vmem:[%s1 + $0x310] sm:$0xff]
      %v1232 = vld [vmem:[%s1 + $0x318] sm:$0xff]
      %v1233 = vld [vmem:[%s1 + $0x320] sm:$0xff]
      %v1234 = vld [vmem:[%s1 + $0x328] sm:$0xff]
      %v1235 = vld [vmem:[%s1 + $0x330] sm:$0xff]
      %v1236 = vld [vmem:[%s1 + $0x338] sm:$0xff]
      %v1237 = vld [vmem:[%s1 + $0x340] sm:$0xff]
      %v1238 = vld [vmem:[%s1 + $0x348] sm:$0xff]
      %v1239 = vld [vmem:[%s1 + $0x350] sm:$0xff]
      %v1240 = vld [vmem:[%s1 + $0x358] sm:$0xff]
      %v1241 = vld [vmem:[%s1 + $0x360] sm:$0xf]
      %v1242 = vld [vmem:[%s1 + $0x368] sm:$0xf]
      %v1243 = vld [vmem:[%s1 + $0x370] sm:$0xf]
      %v1244 = vld [vmem:[%s1 + $0x378] sm:$0xf]
      %v1245 = vld [vmem:[%s1 + $0x380] sm:$0xf]
      %v1246 = vld [vmem:[%s1 + $0x388] sm:$0xf]
      %v1247 = vld [vmem:[%s1 + $0x390] sm:$0xf]
      %v1248 = vld [vmem:[%s1 + $0x398] sm:$0xf]
      %v1249 = vld [vmem:[%s1 + $0x3a0] sm:$0xf]
      %v1250 = vmul.f32 %v1005, %v1133
      %v1251 = vmul.f32 %v1007, %v1134
      %v1252 = vmul.f32 %v1009, %v1135
      %v1253 = vmul.f32 %v1011, %v1136
      %v1254 = vmul.f32 %v1013, %v1137
      %v1255 = vmul.f32 %v1015, %v1138
      %v1256 = vmul.f32 %v1017, %v1139
      %v1257 = vmul.f32 %v1019, %v1140
      %v1258 = vmul.f32 %v1021, %v1141
      %v1259 = vmul.f32 %v1022, %v1142
      %v1260 = vmul.f32 %v1023, %v1143
      %v1261 = vmul.f32 %v1024, %v1144
      %v1262 = vmul.f32 %v1025, %v1145
      %v1263 = vmul.f32 %v1026, %v1146
      %v1264 = vmul.f32 %v1027, %v1147
      %v1265 = vmul.f32 %v1028, %v1148
      %v1266 = vmul.f32 %v1029, %v1149
      %v1267 = vmul.f32 %v1030, %v1150
      %v1268 = vmul.f32 %v1031, %v1151
      %v1269 = vmul.f32 %v1032, %v1152
      %v1270 = vmul.f32 %v1033, %v1153
      %v1271 = vmul.f32 %v1034, %v1154
      %v1272 = vmul.f32 %v1035, %v1155
      %v1273 = vmul.f32 %v1036, %v1156
      %v1274 = vmul.f32 %v1037, %v1157
      %v1275 = vmul.f32 %v1038, %v1158
      %v1276 = vmul.f32 %v1039, %v1159
      %v1277 = vmul.f32 %v1040, %v1160
      %v1278 = vmul.f32 %v1041, %v1161
      %v1279 = vmul.f32 %v1042, %v1162
      %v1280 = vmul.f32 %v1043, %v1163
      %v1281 = vmul.f32 %v1044, %v1164
      %v1282 = vmul.f32 %v1045, %v1165
      %v1283 = vmul.f32 %v1046, %v1166
      %v1284 = vmul.f32 %v1047, %v1167
      %v1285 = vmul.f32 %v1048, %v1168
      %v1286 = vmul.f32 %v1049, %v1169
      %v1287 = vmul.f32 %v1050, %v1170
      %v1288 = vmul.f32 %v1051, %v1171
      %v1289 = vmul.f32 %v1052, %v1172
      %v1290 = vmul.f32 %v1053, %v1173
      %v1291 = vmul.f32 %v1054, %v1174
      %v1292 = vmul.f32 %v1055, %v1175
      %v1293 = vmul.f32 %v1056, %v1176
      %v1294 = vmul.f32 %v1057, %v1177
      %v1295 = vmul.f32 %v1058, %v1178
      %v1296 = vmul.f32 %v1059, %v1179
      %v1297 = vmul.f32 %v1060, %v1180
      %v1298 = vmul.f32 %v1061, %v1181
      %v1299 = vmul.f32 %v1062, %v1182
      %v1300 = vmul.f32 %v1063, %v1183
      %v1301 = vmul.f32 %v1064, %v1184
      %v1302 = vmul.f32 %v1065, %v1185
      %v1303 = vmul.f32 %v1066, %v1186
      %v1304 = vmul.f32 %v1067, %v1187
      %v1305 = vmul.f32 %v1068, %v1188
      %v1306 = vmul.f32 %v1069, %v1189
      %v1307 = vmul.f32 %v1070, %v1190
      %v1308 = vmul.f32 %v1071, %v1191
      %v1309 = vmul.f32 %v1072, %v1192
      %v1310 = vmul.f32 %v1073, %v1193
      %v1311 = vmul.f32 %v1074, %v1194
      %v1312 = vmul.f32 %v1075, %v1195
      %v1313 = vmul.f32 %v1076, %v1196
      %v1314 = vmul.f32 %v1077, %v1197
      %v1315 = vmul.f32 %v1078, %v1198
      %v1316 = vmul.f32 %v1079, %v1199
      %v1317 = vmul.f32 %v1080, %v1200
      %v1318 = vmul.f32 %v1081, %v1201
      %v1319 = vmul.f32 %v1082, %v1202
      %v1320 = vmul.f32 %v1083, %v1203
      %v1321 = vmul.f32 %v1084, %v1204
      %v1322 = vmul.f32 %v1085, %v1205
      %v1323 = vmul.f32 %v1086, %v1206
      %v1324 = vmul.f32 %v1087, %v1207
      %v1325 = vmul.f32 %v1088, %v1208
      %v1326 = vmul.f32 %v1089, %v1209
      %v1327 = vmul.f32 %v1090, %v1210
      %v1328 = vmul.f32 %v1091, %v1211
      %v1329 = vmul.f32 %v1092, %v1212
      %v1330 = vmul.f32 %v1093, %v1213
      %v1331 = vmul.f32 %v1094, %v1214
      %v1332 = vmul.f32 %v1095, %v1215
      %v1333 = vmul.f32 %v1096, %v1216
      %v1334 = vmul.f32 %v1097, %v1217
      %v1335 = vmul.f32 %v1098, %v1218
      %v1336 = vmul.f32 %v1099, %v1219
      %v1337 = vmul.f32 %v1100, %v1220
      %v1338 = vmul.f32 %v1101, %v1221
      %v1339 = vmul.f32 %v1102, %v1222
      %v1340 = vmul.f32 %v1103, %v1223
      %v1341 = vmul.f32 %v1104, %v1224
      %v1342 = vmul.f32 %v1105, %v1225
      %v1343 = vmul.f32 %v1106, %v1226
      %v1344 = vmul.f32 %v1107, %v1227
      %v1345 = vmul.f32 %v1108, %v1228
      %v1346 = vmul.f32 %v1109, %v1229
      %v1347 = vmul.f32 %v1110, %v1230
      %v1348 = vmul.f32 %v1111, %v1231
      %v1349 = vmul.f32 %v1112, %v1232
      %v1350 = vmul.f32 %v1113, %v1233
      %v1351 = vmul.f32 %v1114, %v1234
      %v1352 = vmul.f32 %v1115, %v1235
      %v1353 = vmul.f32 %v1116, %v1236
      %v1354 = vmul.f32 %v1117, %v1237
      %v1355 = vmul.f32 %v1118, %v1238
      %v1356 = vmul.f32 %v1119, %v1239
      %v1357 = vmul.f32 %v1120, %v1240
      %v1358 = vmul.f32 %v1121, %v1241
      %v1359 = vmul.f32 %v1122, %v1242
      %v1360 = vmul.f32 %v1123, %v1243
      %v1361 = vmul.f32 %v1124, %v1244
      %v1362 = vmul.f32 %v1125, %v1245
      %v1363 = vmul.f32 %v1126, %v1246
      %v1364 = vmul.f32 %v1127, %v1247
      %v1365 = vmul.f32 %v1128, %v1248
      %v1366 = vmul.f32 %v1129, %v1249
      %v1367 = vadd.f32 %v1250, %v1251
      %v1368 = vadd.f32 %v1367, %v1252
      %v1369 = vadd.f32 %v1368, %v1253
      %v1370 = vadd.f32 %v1369, %v1254
      %v1371 = vadd.f32 %v1370, %v1255
      %v1372 = vadd.f32 %v1371, %v1256
      %v1373 = vadd.f32 %v1372, %v1257
      %v1374 = vsel %vm437, %v1258, 0.0
      %v1375 = vadd.f32 %v1373, %v1374
      %1376 = vadd.xlane.f32.xlu0 %v1375
      %v1377 = vpop.xlane.xlu0 %1376
      %v1378 = vadd.f32 %v1259, %v1260
      %v1379 = vadd.f32 %v1378, %v1261
      %v1380 = vadd.f32 %v1379, %v1262
      %v1381 = vadd.f32 %v1380, %v1263
      %v1382 = vadd.f32 %v1381, %v1264
      %v1383 = vadd.f32 %v1382, %v1265
      %v1384 = vadd.f32 %v1383, %v1266
      %v1385 = vsel %vm437, %v1267, 0.0
      %v1386 = vadd.f32 %v1384, %v1385
      %1387 = vadd.xlane.f32.xlu0 %v1386
      %v1388 = vpop.xlane.xlu0 %1387
      %v1389 = vadd.f32 %v1268, %v1269
      %v1390 = vadd.f32 %v1389, %v1270
      %v1391 = vadd.f32 %v1390, %v1271
      %v1392 = vadd.f32 %v1391, %v1272
      %v1393 = vadd.f32 %v1392, %v1273
      %v1394 = vadd.f32 %v1393, %v1274
      %v1395 = vadd.f32 %v1394, %v1275
      %v1396 = vsel %vm437, %v1276, 0.0
      %v1397 = vadd.f32 %v1395, %v1396
      %1398 = vadd.xlane.f32.xlu0 %v1397
      %v1399 = vpop.xlane.xlu0 %1398
      %v1400 = vadd.f32 %v1277, %v1278
      %v1401 = vadd.f32 %v1400, %v1279
      %v1402 = vadd.f32 %v1401, %v1280
      %v1403 = vadd.f32 %v1402, %v1281
      %v1404 = vadd.f32 %v1403, %v1282
      %v1405 = vadd.f32 %v1404, %v1283
      %v1406 = vadd.f32 %v1405, %v1284
      %v1407 = vsel %vm437, %v1285, 0.0
      %v1408 = vadd.f32 %v1406, %v1407
      %1409 = vadd.xlane.f32.xlu0 %v1408
      %v1410 = vpop.xlane.xlu0 %1409
      %v1411 = vadd.f32 %v1286, %v1287
      %v1412 = vadd.f32 %v1411, %v1288
      %v1413 = vadd.f32 %v1412, %v1289
      %v1414 = vadd.f32 %v1413, %v1290
      %v1415 = vadd.f32 %v1414, %v1291
      %v1416 = vadd.f32 %v1415, %v1292
      %v1417 = vadd.f32 %v1416, %v1293
      %v1418 = vsel %vm437, %v1294, 0.0
      %v1419 = vadd.f32 %v1417, %v1418
      %1420 = vadd.xlane.f32.xlu0 %v1419
      %v1421 = vpop.xlane.xlu0 %1420
      %v1422 = vadd.f32 %v1295, %v1296
      %v1423 = vadd.f32 %v1422, %v1297
      %v1424 = vadd.f32 %v1423, %v1298
      %v1425 = vadd.f32 %v1424, %v1299
      %v1426 = vadd.f32 %v1425, %v1300
      %v1427 = vadd.f32 %v1426, %v1301
      %v1428 = vadd.f32 %v1427, %v1302
      %v1429 = vsel %vm437, %v1303, 0.0
      %v1430 = vadd.f32 %v1428, %v1429
      %1431 = vadd.xlane.f32.xlu0 %v1430
      %v1432 = vpop.xlane.xlu0 %1431
      %v1433 = vadd.f32 %v1304, %v1305
      %v1434 = vadd.f32 %v1433, %v1306
      %v1435 = vadd.f32 %v1434, %v1307
      %v1436 = vadd.f32 %v1435, %v1308
      %v1437 = vadd.f32 %v1436, %v1309
      %v1438 = vadd.f32 %v1437, %v1310
      %v1439 = vadd.f32 %v1438, %v1311
      %v1440 = vsel %vm437, %v1312, 0.0
      %v1441 = vadd.f32 %v1439, %v1440
      %1442 = vadd.xlane.f32.xlu0 %v1441
      %v1443 = vpop.xlane.xlu0 %1442
      %v1444 = vadd.f32 %v1313, %v1314
      %v1445 = vadd.f32 %v1444, %v1315
      %v1446 = vadd.f32 %v1445, %v1316
      %v1447 = vadd.f32 %v1446, %v1317
      %v1448 = vadd.f32 %v1447, %v1318
      %v1449 = vadd.f32 %v1448, %v1319
      %v1450 = vadd.f32 %v1449, %v1320
      %v1451 = vsel %vm437, %v1321, 0.0
      %v1452 = vadd.f32 %v1450, %v1451
      %1453 = vadd.xlane.f32.xlu0 %v1452
      %v1454 = vpop.xlane.xlu0 %1453
      %v1455 = vadd.f32 %v1322, %v1323
      %v1456 = vadd.f32 %v1455, %v1324
      %v1457 = vadd.f32 %v1456, %v1325
      %v1458 = vadd.f32 %v1457, %v1326
      %v1459 = vadd.f32 %v1458, %v1327
      %v1460 = vadd.f32 %v1459, %v1328
      %v1461 = vadd.f32 %v1460, %v1329
      %v1462 = vsel %vm437, %v1330, 0.0
      %v1463 = vadd.f32 %v1461, %v1462
      %1464 = vadd.xlane.f32.xlu0 %v1463
      %v1465 = vpop.xlane.xlu0 %1464
      %v1466 = vadd.f32 %v1331, %v1332
      %v1467 = vadd.f32 %v1466, %v1333
      %v1468 = vadd.f32 %v1467, %v1334
      %v1469 = vadd.f32 %v1468, %v1335
      %v1470 = vadd.f32 %v1469, %v1336
      %v1471 = vadd.f32 %v1470, %v1337
      %v1472 = vadd.f32 %v1471, %v1338
      %v1473 = vsel %vm437, %v1339, 0.0
      %v1474 = vadd.f32 %v1472, %v1473
      %1475 = vadd.xlane.f32.xlu0 %v1474
      %v1476 = vpop.xlane.xlu0 %1475
      %v1477 = vadd.f32 %v1340, %v1341
      %v1478 = vadd.f32 %v1477, %v1342
      %v1479 = vadd.f32 %v1478, %v1343
      %v1480 = vadd.f32 %v1479, %v1344
      %v1481 = vadd.f32 %v1480, %v1345
      %v1482 = vadd.f32 %v1481, %v1346
      %v1483 = vadd.f32 %v1482, %v1347
      %v1484 = vsel %vm437, %v1348, 0.0
      %v1485 = vadd.f32 %v1483, %v1484
      %1486 = vadd.xlane.f32.xlu0 %v1485
      %v1487 = vpop.xlane.xlu0 %1486
      %v1488 = vadd.f32 %v1349, %v1350
      %v1489 = vadd.f32 %v1488, %v1351
      %v1490 = vadd.f32 %v1489, %v1352
      %v1491 = vadd.f32 %v1490, %v1353
      %v1492 = vadd.f32 %v1491, %v1354
      %v1493 = vadd.f32 %v1492, %v1355
      %v1494 = vadd.f32 %v1493, %v1356
      %v1495 = vsel %vm437, %v1357, 0.0
      %v1496 = vadd.f32 %v1494, %v1495
      %1497 = vadd.xlane.f32.xlu0 %v1496
      %v1498 = vpop.xlane.xlu0 %1497
      %v1499 = vsel %vm295, %v1358, 0.0
      %v1500 = vsel %vm295, %v1359, 0.0
      %v1501 = vadd.f32 %v1499, %v1500
      %v1502 = vsel %vm295, %v1360, 0.0
      %v1503 = vadd.f32 %v1501, %v1502
      %v1504 = vsel %vm295, %v1361, 0.0
      %v1505 = vadd.f32 %v1503, %v1504
      %v1506 = vsel %vm295, %v1362, 0.0
      %v1507 = vadd.f32 %v1505, %v1506
      %v1508 = vsel %vm295, %v1363, 0.0
      %v1509 = vadd.f32 %v1507, %v1508
      %v1510 = vsel %vm295, %v1364, 0.0
      %v1511 = vadd.f32 %v1509, %v1510
      %v1512 = vsel %vm295, %v1365, 0.0
      %v1513 = vadd.f32 %v1511, %v1512
      %v1514 = vsel %vm461, %v1366, 0.0
      %v1515 = vadd.f32 %v1513, %v1514
      %1516 = vadd.xlane.f32.xlu0 %v1515
      %v1517 = vpop.xlane.xlu0 %1516
      %v1518 = vadd.f32 %v1377, %v1388
      %v1519 = vadd.f32 %v1518, %v1399
      %v1520 = vadd.f32 %v1519, %v1410
      %v1521 = vadd.f32 %v1520, %v1421
      %v1522 = vadd.f32 %v1521, %v1432
      %v1523 = vadd.f32 %v1522, %v1443
      %v1524 = vadd.f32 %v1523, %v1454
      %v1525 = vadd.f32 %v1524, %v1465
      %v1526 = vadd.f32 %v1525, %v1476
      %v1527 = vadd.f32 %v1526, %v1487
      %v1528 = vadd.f32 %v1527, %v1498
      %v1529 = vsel %vm295, %v1517, 0.0
      %v1530 = vadd.f32 %v1528, %v1529
      %v1531 = vrot.slane %v1530, 4
      %v1532 = vadd.f32 %v1530, %v1531
      %v1533 = vrot.slane %v1532, 2
      %v1534 = vadd.f32 %v1532, %v1533
      %v1535 = vrot.slane %v1534, 1
      %v1536 = vadd.f32 %v1534, %v1535
      %vm1537 = vcmp.eq.s32.totalorder %v1131, 0
      %v1538 = vsel %vm1537, %v1536, 0.0
      %v1539 = vadd.f32 %v1132, %v1538
      %s1540 = scalar_lea.vmem %s1, 936
      %v1541 = vld [vmem:[%s1540] sm:$0xff]
      %v1542 = vld [vmem:[%s1540 + $0x8] sm:$0xff]
      %v1543 = vld [vmem:[%s1540 + $0x10] sm:$0xff]
      %v1544 = vld [vmem:[%s1540 + $0x18] sm:$0xff]
      %v1545 = vld [vmem:[%s1540 + $0x20] sm:$0xff]
      %v1546 = vld [vmem:[%s1540 + $0x28] sm:$0xff]
      %v1547 = vld [vmem:[%s1540 + $0x30] sm:$0xff]
      %v1548 = vld [vmem:[%s1540 + $0x38] sm:$0xff]
      %v1549 = vld [vmem:[%s1540 + $0x40] sm:$0xff]
      %v1550 = vld [vmem:[%s1540 + $0x48] sm:$0xff]
      %v1551 = vld [vmem:[%s1540 + $0x50] sm:$0xff]
      %v1552 = vld [vmem:[%s1540 + $0x58] sm:$0xff]
      %v1553 = vld [vmem:[%s1540 + $0x60] sm:$0xff]
      %v1554 = vld [vmem:[%s1540 + $0x68] sm:$0xff]
      %v1555 = vld [vmem:[%s1540 + $0x70] sm:$0xff]
      %v1556 = vld [vmem:[%s1540 + $0x78] sm:$0xff]
      %v1557 = vld [vmem:[%s1540 + $0x80] sm:$0xff]
      %v1558 = vld [vmem:[%s1540 + $0x88] sm:$0xff]
      %v1559 = vld [vmem:[%s1540 + $0x90] sm:$0xff]
      %v1560 = vld [vmem:[%s1540 + $0x98] sm:$0xff]
      %v1561 = vld [vmem:[%s1540 + $0xa0] sm:$0xff]
      %v1562 = vld [vmem:[%s1540 + $0xa8] sm:$0xff]
      %v1563 = vld [vmem:[%s1540 + $0xb0] sm:$0xff]
      %v1564 = vld [vmem:[%s1540 + $0xb8] sm:$0xff]
      %v1565 = vld [vmem:[%s1540 + $0xc0] sm:$0xff]
      %v1566 = vld [vmem:[%s1540 + $0xc8] sm:$0xff]
      %v1567 = vld [vmem:[%s1540 + $0xd0] sm:$0xff]
      %v1568 = vld [vmem:[%s1540 + $0xd8] sm:$0xff]
      %v1569 = vld [vmem:[%s1540 + $0xe0] sm:$0xff]
      %v1570 = vld [vmem:[%s1540 + $0xe8] sm:$0xff]
      %v1571 = vld [vmem:[%s1540 + $0xf0] sm:$0xff]
      %v1572 = vld [vmem:[%s1540 + $0xf8] sm:$0xff]
      %v1573 = vld [vmem:[%s1540 + $0x100] sm:$0xff]
      %v1574 = vld [vmem:[%s1540 + $0x108] sm:$0xff]
      %v1575 = vld [vmem:[%s1540 + $0x110] sm:$0xff]
      %v1576 = vld [vmem:[%s1540 + $0x118] sm:$0xff]
      %v1577 = vld [vmem:[%s1540 + $0x120] sm:$0xff]
      %v1578 = vld [vmem:[%s1540 + $0x128] sm:$0xff]
      %v1579 = vld [vmem:[%s1540 + $0x130] sm:$0xff]
      %v1580 = vld [vmem:[%s1540 + $0x138] sm:$0xff]
      %v1581 = vld [vmem:[%s1540 + $0x140] sm:$0xff]
      %v1582 = vld [vmem:[%s1540 + $0x148] sm:$0xff]
      %v1583 = vld [vmem:[%s1540 + $0x150] sm:$0xff]
      %v1584 = vld [vmem:[%s1540 + $0x158] sm:$0xff]
      %v1585 = vld [vmem:[%s1540 + $0x160] sm:$0xff]
      %v1586 = vld [vmem:[%s1540 + $0x168] sm:$0xff]
      %v1587 = vld [vmem:[%s1540 + $0x170] sm:$0xff]
      %v1588 = vld [vmem:[%s1540 + $0x178] sm:$0xff]
      %v1589 = vld [vmem:[%s1540 + $0x180] sm:$0xff]
      %v1590 = vld [vmem:[%s1540 + $0x188] sm:$0xff]
      %v1591 = vld [vmem:[%s1540 + $0x190] sm:$0xff]
      %v1592 = vld [vmem:[%s1540 + $0x198] sm:$0xff]
      %v1593 = vld [vmem:[%s1540 + $0x1a0] sm:$0xff]
      %v1594 = vld [vmem:[%s1540 + $0x1a8] sm:$0xff]
      %v1595 = vld [vmem:[%s1540 + $0x1b0] sm:$0xff]
      %v1596 = vld [vmem:[%s1540 + $0x1b8] sm:$0xff]
      %v1597 = vld [vmem:[%s1540 + $0x1c0] sm:$0xff]
      %v1598 = vld [vmem:[%s1540 + $0x1c8] sm:$0xff]
      %v1599 = vld [vmem:[%s1540 + $0x1d0] sm:$0xff]
      %v1600 = vld [vmem:[%s1540 + $0x1d8] sm:$0xff]
      %v1601 = vld [vmem:[%s1540 + $0x1e0] sm:$0xff]
      %v1602 = vld [vmem:[%s1540 + $0x1e8] sm:$0xff]
      %v1603 = vld [vmem:[%s1540 + $0x1f0] sm:$0xff]
      %v1604 = vld [vmem:[%s1540 + $0x1f8] sm:$0xff]
      %v1605 = vld [vmem:[%s1540 + $0x200] sm:$0xff]
      %v1606 = vld [vmem:[%s1540 + $0x208] sm:$0xff]
      %v1607 = vld [vmem:[%s1540 + $0x210] sm:$0xff]
      %v1608 = vld [vmem:[%s1540 + $0x218] sm:$0xff]
      %v1609 = vld [vmem:[%s1540 + $0x220] sm:$0xff]
      %v1610 = vld [vmem:[%s1540 + $0x228] sm:$0xff]
      %v1611 = vld [vmem:[%s1540 + $0x230] sm:$0xff]
      %v1612 = vld [vmem:[%s1540 + $0x238] sm:$0xff]
      %v1613 = vld [vmem:[%s1540 + $0x240] sm:$0xff]
      %v1614 = vld [vmem:[%s1540 + $0x248] sm:$0xff]
      %v1615 = vld [vmem:[%s1540 + $0x250] sm:$0xff]
      %v1616 = vld [vmem:[%s1540 + $0x258] sm:$0xff]
      %v1617 = vld [vmem:[%s1540 + $0x260] sm:$0xff]
      %v1618 = vld [vmem:[%s1540 + $0x268] sm:$0xff]
      %v1619 = vld [vmem:[%s1540 + $0x270] sm:$0xff]
      %v1620 = vld [vmem:[%s1540 + $0x278] sm:$0xff]
      %v1621 = vld [vmem:[%s1540 + $0x280] sm:$0xff]
      %v1622 = vld [vmem:[%s1540 + $0x288] sm:$0xff]
      %v1623 = vld [vmem:[%s1540 + $0x290] sm:$0xff]
      %v1624 = vld [vmem:[%s1540 + $0x298] sm:$0xff]
      %v1625 = vld [vmem:[%s1540 + $0x2a0] sm:$0xff]
      %v1626 = vld [vmem:[%s1540 + $0x2a8] sm:$0xff]
      %v1627 = vld [vmem:[%s1540 + $0x2b0] sm:$0xff]
      %v1628 = vld [vmem:[%s1540 + $0x2b8] sm:$0xff]
      %v1629 = vld [vmem:[%s1540 + $0x2c0] sm:$0xff]
      %v1630 = vld [vmem:[%s1540 + $0x2c8] sm:$0xff]
      %v1631 = vld [vmem:[%s1540 + $0x2d0] sm:$0xff]
      %v1632 = vld [vmem:[%s1540 + $0x2d8] sm:$0xff]
      %v1633 = vld [vmem:[%s1540 + $0x2e0] sm:$0xff]
      %v1634 = vld [vmem:[%s1540 + $0x2e8] sm:$0xff]
      %v1635 = vld [vmem:[%s1540 + $0x2f0] sm:$0xff]
      %v1636 = vld [vmem:[%s1540 + $0x2f8] sm:$0xff]
      %v1637 = vld [vmem:[%s1540 + $0x300] sm:$0xff]
      %v1638 = vld [vmem:[%s1540 + $0x308] sm:$0xff]
      %v1639 = vld [vmem:[%s1540 + $0x310] sm:$0xff]
      %v1640 = vld [vmem:[%s1540 + $0x318] sm:$0xff]
      %v1641 = vld [vmem:[%s1540 + $0x320] sm:$0xff]
      %v1642 = vld [vmem:[%s1540 + $0x328] sm:$0xff]
      %v1643 = vld [vmem:[%s1540 + $0x330] sm:$0xff]
      %v1644 = vld [vmem:[%s1540 + $0x338] sm:$0xff]
      %v1645 = vld [vmem:[%s1540 + $0x340] sm:$0xff]
      %v1646 = vld [vmem:[%s1540 + $0x348] sm:$0xff]
      %v1647 = vld [vmem:[%s1540 + $0x350] sm:$0xff]
      %v1648 = vld [vmem:[%s1540 + $0x358] sm:$0xff]
      %v1649 = vld [vmem:[%s1540 + $0x360] sm:$0xf]
      %v1650 = vld [vmem:[%s1540 + $0x368] sm:$0xf]
      %v1651 = vld [vmem:[%s1540 + $0x370] sm:$0xf]
      %v1652 = vld [vmem:[%s1540 + $0x378] sm:$0xf]
      %v1653 = vld [vmem:[%s1540 + $0x380] sm:$0xf]
      %v1654 = vld [vmem:[%s1540 + $0x388] sm:$0xf]
      %v1655 = vld [vmem:[%s1540 + $0x390] sm:$0xf]
      %v1656 = vld [vmem:[%s1540 + $0x398] sm:$0xf]
      %v1657 = vld [vmem:[%s1540 + $0x3a0] sm:$0xf]
      %v1658 = vmul.f32 %v1005, %v1541
      %v1659 = vmul.f32 %v1007, %v1542
      %v1660 = vmul.f32 %v1009, %v1543
      %v1661 = vmul.f32 %v1011, %v1544
      %v1662 = vmul.f32 %v1013, %v1545
      %v1663 = vmul.f32 %v1015, %v1546
      %v1664 = vmul.f32 %v1017, %v1547
      %v1665 = vmul.f32 %v1019, %v1548
      %v1666 = vmul.f32 %v1021, %v1549
      %v1667 = vmul.f32 %v1022, %v1550
      %v1668 = vmul.f32 %v1023, %v1551
      %v1669 = vmul.f32 %v1024, %v1552
      %v1670 = vmul.f32 %v1025, %v1553
      %v1671 = vmul.f32 %v1026, %v1554
      %v1672 = vmul.f32 %v1027, %v1555
      %v1673 = vmul.f32 %v1028, %v1556
      %v1674 = vmul.f32 %v1029, %v1557
      %v1675 = vmul.f32 %v1030, %v1558
      %v1676 = vmul.f32 %v1031, %v1559
      %v1677 = vmul.f32 %v1032, %v1560
      %v1678 = vmul.f32 %v1033, %v1561
      %v1679 = vmul.f32 %v1034, %v1562
      %v1680 = vmul.f32 %v1035, %v1563
      %v1681 = vmul.f32 %v1036, %v1564
      %v1682 = vmul.f32 %v1037, %v1565
      %v1683 = vmul.f32 %v1038, %v1566
      %v1684 = vmul.f32 %v1039, %v1567
      %v1685 = vmul.f32 %v1040, %v1568
      %v1686 = vmul.f32 %v1041, %v1569
      %v1687 = vmul.f32 %v1042, %v1570
      %v1688 = vmul.f32 %v1043, %v1571
      %v1689 = vmul.f32 %v1044, %v1572
      %v1690 = vmul.f32 %v1045, %v1573
      %v1691 = vmul.f32 %v1046, %v1574
      %v1692 = vmul.f32 %v1047, %v1575
      %v1693 = vmul.f32 %v1048, %v1576
      %v1694 = vmul.f32 %v1049, %v1577
      %v1695 = vmul.f32 %v1050, %v1578
      %v1696 = vmul.f32 %v1051, %v1579
      %v1697 = vmul.f32 %v1052, %v1580
      %v1698 = vmul.f32 %v1053, %v1581
      %v1699 = vmul.f32 %v1054, %v1582
      %v1700 = vmul.f32 %v1055, %v1583
      %v1701 = vmul.f32 %v1056, %v1584
      %v1702 = vmul.f32 %v1057, %v1585
      %v1703 = vmul.f32 %v1058, %v1586
      %v1704 = vmul.f32 %v1059, %v1587
      %v1705 = vmul.f32 %v1060, %v1588
      %v1706 = vmul.f32 %v1061, %v1589
      %v1707 = vmul.f32 %v1062, %v1590
      %v1708 = vmul.f32 %v1063, %v1591
      %v1709 = vmul.f32 %v1064, %v1592
      %v1710 = vmul.f32 %v1065, %v1593
      %v1711 = vmul.f32 %v1066, %v1594
      %v1712 = vmul.f32 %v1067, %v1595
      %v1713 = vmul.f32 %v1068, %v1596
      %v1714 = vmul.f32 %v1069, %v1597
      %v1715 = vmul.f32 %v1070, %v1598
      %v1716 = vmul.f32 %v1071, %v1599
      %v1717 = vmul.f32 %v1072, %v1600
      %v1718 = vmul.f32 %v1073, %v1601
      %v1719 = vmul.f32 %v1074, %v1602
      %v1720 = vmul.f32 %v1075, %v1603
      %v1721 = vmul.f32 %v1076, %v1604
      %v1722 = vmul.f32 %v1077, %v1605
      %v1723 = vmul.f32 %v1078, %v1606
      %v1724 = vmul.f32 %v1079, %v1607
      %v1725 = vmul.f32 %v1080, %v1608
      %v1726 = vmul.f32 %v1081, %v1609
      %v1727 = vmul.f32 %v1082, %v1610
      %v1728 = vmul.f32 %v1083, %v1611
      %v1729 = vmul.f32 %v1084, %v1612
      %v1730 = vmul.f32 %v1085, %v1613
      %v1731 = vmul.f32 %v1086, %v1614
      %v1732 = vmul.f32 %v1087, %v1615
      %v1733 = vmul.f32 %v1088, %v1616
      %v1734 = vmul.f32 %v1089, %v1617
      %v1735 = vmul.f32 %v1090, %v1618
      %v1736 = vmul.f32 %v1091, %v1619
      %v1737 = vmul.f32 %v1092, %v1620
      %v1738 = vmul.f32 %v1093, %v1621
      %v1739 = vmul.f32 %v1094, %v1622
      %v1740 = vmul.f32 %v1095, %v1623
      %v1741 = vmul.f32 %v1096, %v1624
      %v1742 = vmul.f32 %v1097, %v1625
      %v1743 = vmul.f32 %v1098, %v1626
      %v1744 = vmul.f32 %v1099, %v1627
      %v1745 = vmul.f32 %v1100, %v1628
      %v1746 = vmul.f32 %v1101, %v1629
      %v1747 = vmul.f32 %v1102, %v1630
      %v1748 = vmul.f32 %v1103, %v1631
      %v1749 = vmul.f32 %v1104, %v1632
      %v1750 = vmul.f32 %v1105, %v1633
      %v1751 = vmul.f32 %v1106, %v1634
      %v1752 = vmul.f32 %v1107, %v1635
      %v1753 = vmul.f32 %v1108, %v1636
      %v1754 = vmul.f32 %v1109, %v1637
      %v1755 = vmul.f32 %v1110, %v1638
      %v1756 = vmul.f32 %v1111, %v1639
      %v1757 = vmul.f32 %v1112, %v1640
      %v1758 = vmul.f32 %v1113, %v1641
      %v1759 = vmul.f32 %v1114, %v1642
      %v1760 = vmul.f32 %v1115, %v1643
      %v1761 = vmul.f32 %v1116, %v1644
      %v1762 = vmul.f32 %v1117, %v1645
      %v1763 = vmul.f32 %v1118, %v1646
      %v1764 = vmul.f32 %v1119, %v1647
      %v1765 = vmul.f32 %v1120, %v1648
      %v1766 = vmul.f32 %v1121, %v1649
      %v1767 = vmul.f32 %v1122, %v1650
      %v1768 = vmul.f32 %v1123, %v1651
      %v1769 = vmul.f32 %v1124, %v1652
      %v1770 = vmul.f32 %v1125, %v1653
      %v1771 = vmul.f32 %v1126, %v1654
      %v1772 = vmul.f32 %v1127, %v1655
      %v1773 = vmul.f32 %v1128, %v1656
      %v1774 = vmul.f32 %v1129, %v1657
      %v1775 = vadd.f32 %v1658, %v1659
      %v1776 = vadd.f32 %v1775, %v1660
      %v1777 = vadd.f32 %v1776, %v1661
      %v1778 = vadd.f32 %v1777, %v1662
      %v1779 = vadd.f32 %v1778, %v1663
      %v1780 = vadd.f32 %v1779, %v1664
      %v1781 = vadd.f32 %v1780, %v1665
      %v1782 = vsel %vm437, %v1666, 0.0
      %v1783 = vadd.f32 %v1781, %v1782
      %1784 = vadd.xlane.f32.xlu0 %v1783
      %v1785 = vpop.xlane.xlu0 %1784
      %v1786 = vadd.f32 %v1667, %v1668
      %v1787 = vadd.f32 %v1786, %v1669
      %v1788 = vadd.f32 %v1787, %v1670
      %v1789 = vadd.f32 %v1788, %v1671
      %v1790 = vadd.f32 %v1789, %v1672
      %v1791 = vadd.f32 %v1790, %v1673
      %v1792 = vadd.f32 %v1791, %v1674
      %v1793 = vsel %vm437, %v1675, 0.0
      %v1794 = vadd.f32 %v1792, %v1793
      %1795 = vadd.xlane.f32.xlu0 %v1794
      %v1796 = vpop.xlane.xlu0 %1795
      %v1797 = vadd.f32 %v1676, %v1677
      %v1798 = vadd.f32 %v1797, %v1678
      %v1799 = vadd.f32 %v1798, %v1679
      %v1800 = vadd.f32 %v1799, %v1680
      %v1801 = vadd.f32 %v1800, %v1681
      %v1802 = vadd.f32 %v1801, %v1682
      %v1803 = vadd.f32 %v1802, %v1683
      %v1804 = vsel %vm437, %v1684, 0.0
      %v1805 = vadd.f32 %v1803, %v1804
      %1806 = vadd.xlane.f32.xlu0 %v1805
      %v1807 = vpop.xlane.xlu0 %1806
      %v1808 = vadd.f32 %v1685, %v1686
      %v1809 = vadd.f32 %v1808, %v1687
      %v1810 = vadd.f32 %v1809, %v1688
      %v1811 = vadd.f32 %v1810, %v1689
      %v1812 = vadd.f32 %v1811, %v1690
      %v1813 = vadd.f32 %v1812, %v1691
      %v1814 = vadd.f32 %v1813, %v1692
      %v1815 = vsel %vm437, %v1693, 0.0
      %v1816 = vadd.f32 %v1814, %v1815
      %1817 = vadd.xlane.f32.xlu0 %v1816
      %v1818 = vpop.xlane.xlu0 %1817
      %v1819 = vadd.f32 %v1694, %v1695
      %v1820 = vadd.f32 %v1819, %v1696
      %v1821 = vadd.f32 %v1820, %v1697
      %v1822 = vadd.f32 %v1821, %v1698
      %v1823 = vadd.f32 %v1822, %v1699
      %v1824 = vadd.f32 %v1823, %v1700
      %v1825 = vadd.f32 %v1824, %v1701
      %v1826 = vsel %vm437, %v1702, 0.0
      %v1827 = vadd.f32 %v1825, %v1826
      %1828 = vadd.xlane.f32.xlu0 %v1827
      %v1829 = vpop.xlane.xlu0 %1828
      %v1830 = vadd.f32 %v1703, %v1704
      %v1831 = vadd.f32 %v1830, %v1705
      %v1832 = vadd.f32 %v1831, %v1706
      %v1833 = vadd.f32 %v1832, %v1707
      %v1834 = vadd.f32 %v1833, %v1708
      %v1835 = vadd.f32 %v1834, %v1709
      %v1836 = vadd.f32 %v1835, %v1710
      %v1837 = vsel %vm437, %v1711, 0.0
      %v1838 = vadd.f32 %v1836, %v1837
      %1839 = vadd.xlane.f32.xlu0 %v1838
      %v1840 = vpop.xlane.xlu0 %1839
      %v1841 = vadd.f32 %v1712, %v1713
      %v1842 = vadd.f32 %v1841, %v1714
      %v1843 = vadd.f32 %v1842, %v1715
      %v1844 = vadd.f32 %v1843, %v1716
      %v1845 = vadd.f32 %v1844, %v1717
      %v1846 = vadd.f32 %v1845, %v1718
      %v1847 = vadd.f32 %v1846, %v1719
      %v1848 = vsel %vm437, %v1720, 0.0
      %v1849 = vadd.f32 %v1847, %v1848
      %1850 = vadd.xlane.f32.xlu0 %v1849
      %v1851 = vpop.xlane.xlu0 %1850
      %v1852 = vadd.f32 %v1721, %v1722
      %v1853 = vadd.f32 %v1852, %v1723
      %v1854 = vadd.f32 %v1853, %v1724
      %v1855 = vadd.f32 %v1854, %v1725
      %v1856 = vadd.f32 %v1855, %v1726
      %v1857 = vadd.f32 %v1856, %v1727
      %v1858 = vadd.f32 %v1857, %v1728
      %v1859 = vsel %vm437, %v1729, 0.0
      %v1860 = vadd.f32 %v1858, %v1859
      %1861 = vadd.xlane.f32.xlu0 %v1860
      %v1862 = vpop.xlane.xlu0 %1861
      %v1863 = vadd.f32 %v1730, %v1731
      %v1864 = vadd.f32 %v1863, %v1732
      %v1865 = vadd.f32 %v1864, %v1733
      %v1866 = vadd.f32 %v1865, %v1734
      %v1867 = vadd.f32 %v1866, %v1735
      %v1868 = vadd.f32 %v1867, %v1736
      %v1869 = vadd.f32 %v1868, %v1737
      %v1870 = vsel %vm437, %v1738, 0.0
      %v1871 = vadd.f32 %v1869, %v1870
      %1872 = vadd.xlane.f32.xlu0 %v1871
      %v1873 = vpop.xlane.xlu0 %1872
      %v1874 = vadd.f32 %v1739, %v1740
      %v1875 = vadd.f32 %v1874, %v1741
      %v1876 = vadd.f32 %v1875, %v1742
      %v1877 = vadd.f32 %v1876, %v1743
      %v1878 = vadd.f32 %v1877, %v1744
      %v1879 = vadd.f32 %v1878, %v1745
      %v1880 = vadd.f32 %v1879, %v1746
      %v1881 = vsel %vm437, %v1747, 0.0
      %v1882 = vadd.f32 %v1880, %v1881
      %1883 = vadd.xlane.f32.xlu0 %v1882
      %v1884 = vpop.xlane.xlu0 %1883
      %v1885 = vadd.f32 %v1748, %v1749
      %v1886 = vadd.f32 %v1885, %v1750
      %v1887 = vadd.f32 %v1886, %v1751
      %v1888 = vadd.f32 %v1887, %v1752
      %v1889 = vadd.f32 %v1888, %v1753
      %v1890 = vadd.f32 %v1889, %v1754
      %v1891 = vadd.f32 %v1890, %v1755
      %v1892 = vsel %vm437, %v1756, 0.0
      %v1893 = vadd.f32 %v1891, %v1892
      %1894 = vadd.xlane.f32.xlu0 %v1893
      %v1895 = vpop.xlane.xlu0 %1894
      %v1896 = vadd.f32 %v1757, %v1758
      %v1897 = vadd.f32 %v1896, %v1759
      %v1898 = vadd.f32 %v1897, %v1760
      %v1899 = vadd.f32 %v1898, %v1761
      %v1900 = vadd.f32 %v1899, %v1762
      %v1901 = vadd.f32 %v1900, %v1763
      %v1902 = vadd.f32 %v1901, %v1764
      %v1903 = vsel %vm437, %v1765, 0.0
      %v1904 = vadd.f32 %v1902, %v1903
      %1905 = vadd.xlane.f32.xlu0 %v1904
      %v1906 = vpop.xlane.xlu0 %1905
      %v1907 = vsel %vm295, %v1766, 0.0
      %v1908 = vsel %vm295, %v1767, 0.0
      %v1909 = vadd.f32 %v1907, %v1908
      %v1910 = vsel %vm295, %v1768, 0.0
      %v1911 = vadd.f32 %v1909, %v1910
      %v1912 = vsel %vm295, %v1769, 0.0
      %v1913 = vadd.f32 %v1911, %v1912
      %v1914 = vsel %vm295, %v1770, 0.0
      %v1915 = vadd.f32 %v1913, %v1914
      %v1916 = vsel %vm295, %v1771, 0.0
      %v1917 = vadd.f32 %v1915, %v1916
      %v1918 = vsel %vm295, %v1772, 0.0
      %v1919 = vadd.f32 %v1917, %v1918
      %v1920 = vsel %vm295, %v1773, 0.0
      %v1921 = vadd.f32 %v1919, %v1920
      %v1922 = vsel %vm461, %v1774, 0.0
      %v1923 = vadd.f32 %v1921, %v1922
      %1924 = vadd.xlane.f32.xlu0 %v1923
      %v1925 = vpop.xlane.xlu0 %1924
      %v1926 = vadd.f32 %v1785, %v1796
      %v1927 = vadd.f32 %v1926, %v1807
      %v1928 = vadd.f32 %v1927, %v1818
      %v1929 = vadd.f32 %v1928, %v1829
      %v1930 = vadd.f32 %v1929, %v1840
      %v1931 = vadd.f32 %v1930, %v1851
      %v1932 = vadd.f32 %v1931, %v1862
      %v1933 = vadd.f32 %v1932, %v1873
      %v1934 = vadd.f32 %v1933, %v1884
      %v1935 = vadd.f32 %v1934, %v1895
      %v1936 = vadd.f32 %v1935, %v1906
      %v1937 = vsel %vm295, %v1925, 0.0
      %v1938 = vadd.f32 %v1936, %v1937
      %v1939 = vrot.slane %v1938, 4
      %v1940 = vadd.f32 %v1938, %v1939
      %v1941 = vrot.slane %v1940, 2
      %v1942 = vadd.f32 %v1940, %v1941
      %v1943 = vrot.slane %v1942, 1
      %v1944 = vadd.f32 %v1942, %v1943
      %vm1945 = vcmp.eq.s32.totalorder %v1131, 1
      %v1946 = vsel %vm1945, %v1944, 0.0
      %v1947 = vadd.f32 %v1539, %v1946
      %s1948 = scalar_lea.vmem %s1, 1872
      %v1949 = vld [vmem:[%s1948] sm:$0xff]
      %v1950 = vld [vmem:[%s1948 + $0x8] sm:$0xff]
      %v1951 = vld [vmem:[%s1948 + $0x10] sm:$0xff]
      %v1952 = vld [vmem:[%s1948 + $0x18] sm:$0xff]
      %v1953 = vld [vmem:[%s1948 + $0x20] sm:$0xff]
      %v1954 = vld [vmem:[%s1948 + $0x28] sm:$0xff]
      %v1955 = vld [vmem:[%s1948 + $0x30] sm:$0xff]
      %v1956 = vld [vmem:[%s1948 + $0x38] sm:$0xff]
      %v1957 = vld [vmem:[%s1948 + $0x40] sm:$0xff]
      %v1958 = vld [vmem:[%s1948 + $0x48] sm:$0xff]
      %v1959 = vld [vmem:[%s1948 + $0x50] sm:$0xff]
      %v1960 = vld [vmem:[%s1948 + $0x58] sm:$0xff]
      %v1961 = vld [vmem:[%s1948 + $0x60] sm:$0xff]
      %v1962 = vld [vmem:[%s1948 + $0x68] sm:$0xff]
      %v1963 = vld [vmem:[%s1948 + $0x70] sm:$0xff]
      %v1964 = vld [vmem:[%s1948 + $0x78] sm:$0xff]
      %v1965 = vld [vmem:[%s1948 + $0x80] sm:$0xff]
      %v1966 = vld [vmem:[%s1948 + $0x88] sm:$0xff]
      %v1967 = vld [vmem:[%s1948 + $0x90] sm:$0xff]
      %v1968 = vld [vmem:[%s1948 + $0x98] sm:$0xff]
      %v1969 = vld [vmem:[%s1948 + $0xa0] sm:$0xff]
      %v1970 = vld [vmem:[%s1948 + $0xa8] sm:$0xff]
      %v1971 = vld [vmem:[%s1948 + $0xb0] sm:$0xff]
      %v1972 = vld [vmem:[%s1948 + $0xb8] sm:$0xff]
      %v1973 = vld [vmem:[%s1948 + $0xc0] sm:$0xff]
      %v1974 = vld [vmem:[%s1948 + $0xc8] sm:$0xff]
      %v1975 = vld [vmem:[%s1948 + $0xd0] sm:$0xff]
      %v1976 = vld [vmem:[%s1948 + $0xd8] sm:$0xff]
      %v1977 = vld [vmem:[%s1948 + $0xe0] sm:$0xff]
      %v1978 = vld [vmem:[%s1948 + $0xe8] sm:$0xff]
      %v1979 = vld [vmem:[%s1948 + $0xf0] sm:$0xff]
      %v1980 = vld [vmem:[%s1948 + $0xf8] sm:$0xff]
      %v1981 = vld [vmem:[%s1948 + $0x100] sm:$0xff]
      %v1982 = vld [vmem:[%s1948 + $0x108] sm:$0xff]
      %v1983 = vld [vmem:[%s1948 + $0x110] sm:$0xff]
      %v1984 = vld [vmem:[%s1948 + $0x118] sm:$0xff]
      %v1985 = vld [vmem:[%s1948 + $0x120] sm:$0xff]
      %v1986 = vld [vmem:[%s1948 + $0x128] sm:$0xff]
      %v1987 = vld [vmem:[%s1948 + $0x130] sm:$0xff]
      %v1988 = vld [vmem:[%s1948 + $0x138] sm:$0xff]
      %v1989 = vld [vmem:[%s1948 + $0x140] sm:$0xff]
      %v1990 = vld [vmem:[%s1948 + $0x148] sm:$0xff]
      %v1991 = vld [vmem:[%s1948 + $0x150] sm:$0xff]
      %v1992 = vld [vmem:[%s1948 + $0x158] sm:$0xff]
      %v1993 = vld [vmem:[%s1948 + $0x160] sm:$0xff]
      %v1994 = vld [vmem:[%s1948 + $0x168] sm:$0xff]
      %v1995 = vld [vmem:[%s1948 + $0x170] sm:$0xff]
      %v1996 = vld [vmem:[%s1948 + $0x178] sm:$0xff]
      %v1997 = vld [vmem:[%s1948 + $0x180] sm:$0xff]
      %v1998 = vld [vmem:[%s1948 + $0x188] sm:$0xff]
      %v1999 = vld [vmem:[%s1948 + $0x190] sm:$0xff]
      %v2000 = vld [vmem:[%s1948 + $0x198] sm:$0xff]
      %v2001 = vld [vmem:[%s1948 + $0x1a0] sm:$0xff]
      %v2002 = vld [vmem:[%s1948 + $0x1a8] sm:$0xff]
      %v2003 = vld [vmem:[%s1948 + $0x1b0] sm:$0xff]
      %v2004 = vld [vmem:[%s1948 + $0x1b8] sm:$0xff]
      %v2005 = vld [vmem:[%s1948 + $0x1c0] sm:$0xff]
      %v2006 = vld [vmem:[%s1948 + $0x1c8] sm:$0xff]
      %v2007 = vld [vmem:[%s1948 + $0x1d0] sm:$0xff]
      %v2008 = vld [vmem:[%s1948 + $0x1d8] sm:$0xff]
      %v2009 = vld [vmem:[%s1948 + $0x1e0] sm:$0xff]
      %v2010 = vld [vmem:[%s1948 + $0x1e8] sm:$0xff]
      %v2011 = vld [vmem:[%s1948 + $0x1f0] sm:$0xff]
      %v2012 = vld [vmem:[%s1948 + $0x1f8] sm:$0xff]
      %v2013 = vld [vmem:[%s1948 + $0x200] sm:$0xff]
      %v2014 = vld [vmem:[%s1948 + $0x208] sm:$0xff]
      %v2015 = vld [vmem:[%s1948 + $0x210] sm:$0xff]
      %v2016 = vld [vmem:[%s1948 + $0x218] sm:$0xff]
      %v2017 = vld [vmem:[%s1948 + $0x220] sm:$0xff]
      %v2018 = vld [vmem:[%s1948 + $0x228] sm:$0xff]
      %v2019 = vld [vmem:[%s1948 + $0x230] sm:$0xff]
      %v2020 = vld [vmem:[%s1948 + $0x238] sm:$0xff]
      %v2021 = vld [vmem:[%s1948 + $0x240] sm:$0xff]
      %v2022 = vld [vmem:[%s1948 + $0x248] sm:$0xff]
      %v2023 = vld [vmem:[%s1948 + $0x250] sm:$0xff]
      %v2024 = vld [vmem:[%s1948 + $0x258] sm:$0xff]
      %v2025 = vld [vmem:[%s1948 + $0x260] sm:$0xff]
      %v2026 = vld [vmem:[%s1948 + $0x268] sm:$0xff]
      %v2027 = vld [vmem:[%s1948 + $0x270] sm:$0xff]
      %v2028 = vld [vmem:[%s1948 + $0x278] sm:$0xff]
      %v2029 = vld [vmem:[%s1948 + $0x280] sm:$0xff]
      %v2030 = vld [vmem:[%s1948 + $0x288] sm:$0xff]
      %v2031 = vld [vmem:[%s1948 + $0x290] sm:$0xff]
      %v2032 = vld [vmem:[%s1948 + $0x298] sm:$0xff]
      %v2033 = vld [vmem:[%s1948 + $0x2a0] sm:$0xff]
      %v2034 = vld [vmem:[%s1948 + $0x2a8] sm:$0xff]
      %v2035 = vld [vmem:[%s1948 + $0x2b0] sm:$0xff]
      %v2036 = vld [vmem:[%s1948 + $0x2b8] sm:$0xff]
      %v2037 = vld [vmem:[%s1948 + $0x2c0] sm:$0xff]
      %v2038 = vld [vmem:[%s1948 + $0x2c8] sm:$0xff]
      %v2039 = vld [vmem:[%s1948 + $0x2d0] sm:$0xff]
      %v2040 = vld [vmem:[%s1948 + $0x2d8] sm:$0xff]
      %v2041 = vld [vmem:[%s1948 + $0x2e0] sm:$0xff]
      %v2042 = vld [vmem:[%s1948 + $0x2e8] sm:$0xff]
      %v2043 = vld [vmem:[%s1948 + $0x2f0] sm:$0xff]
      %v2044 = vld [vmem:[%s1948 + $0x2f8] sm:$0xff]
      %v2045 = vld [vmem:[%s1948 + $0x300] sm:$0xff]
      %v2046 = vld [vmem:[%s1948 + $0x308] sm:$0xff]
      %v2047 = vld [vmem:[%s1948 + $0x310] sm:$0xff]
      %v2048 = vld [vmem:[%s1948 + $0x318] sm:$0xff]
      %v2049 = vld [vmem:[%s1948 + $0x320] sm:$0xff]
      %v2050 = vld [vmem:[%s1948 + $0x328] sm:$0xff]
      %v2051 = vld [vmem:[%s1948 + $0x330] sm:$0xff]
      %v2052 = vld [vmem:[%s1948 + $0x338] sm:$0xff]
      %v2053 = vld [vmem:[%s1948 + $0x340] sm:$0xff]
      %v2054 = vld [vmem:[%s1948 + $0x348] sm:$0xff]
      %v2055 = vld [vmem:[%s1948 + $0x350] sm:$0xff]
      %v2056 = vld [vmem:[%s1948 + $0x358] sm:$0xff]
      %v2057 = vld [vmem:[%s1948 + $0x360] sm:$0xf]
      %v2058 = vld [vmem:[%s1948 + $0x368] sm:$0xf]
      %v2059 = vld [vmem:[%s1948 + $0x370] sm:$0xf]
      %v2060 = vld [vmem:[%s1948 + $0x378] sm:$0xf]
      %v2061 = vld [vmem:[%s1948 + $0x380] sm:$0xf]
      %v2062 = vld [vmem:[%s1948 + $0x388] sm:$0xf]
      %v2063 = vld [vmem:[%s1948 + $0x390] sm:$0xf]
      %v2064 = vld [vmem:[%s1948 + $0x398] sm:$0xf]
      %v2065 = vld [vmem:[%s1948 + $0x3a0] sm:$0xf]
      %v2066 = vmul.f32 %v1005, %v1949
      %v2067 = vmul.f32 %v1007, %v1950
      %v2068 = vmul.f32 %v1009, %v1951
      %v2069 = vmul.f32 %v1011, %v1952
      %v2070 = vmul.f32 %v1013, %v1953
      %v2071 = vmul.f32 %v1015, %v1954
      %v2072 = vmul.f32 %v1017, %v1955
      %v2073 = vmul.f32 %v1019, %v1956
      %v2074 = vmul.f32 %v1021, %v1957
      %v2075 = vmul.f32 %v1022, %v1958
      %v2076 = vmul.f32 %v1023, %v1959
      %v2077 = vmul.f32 %v1024, %v1960
      %v2078 = vmul.f32 %v1025, %v1961
      %v2079 = vmul.f32 %v1026, %v1962
      %v2080 = vmul.f32 %v1027, %v1963
      %v2081 = vmul.f32 %v1028, %v1964
      %v2082 = vmul.f32 %v1029, %v1965
      %v2083 = vmul.f32 %v1030, %v1966
      %v2084 = vmul.f32 %v1031, %v1967
      %v2085 = vmul.f32 %v1032, %v1968
      %v2086 = vmul.f32 %v1033, %v1969
      %v2087 = vmul.f32 %v1034, %v1970
      %v2088 = vmul.f32 %v1035, %v1971
      %v2089 = vmul.f32 %v1036, %v1972
      %v2090 = vmul.f32 %v1037, %v1973
      %v2091 = vmul.f32 %v1038, %v1974
      %v2092 = vmul.f32 %v1039, %v1975
      %v2093 = vmul.f32 %v1040, %v1976
      %v2094 = vmul.f32 %v1041, %v1977
      %v2095 = vmul.f32 %v1042, %v1978
      %v2096 = vmul.f32 %v1043, %v1979
      %v2097 = vmul.f32 %v1044, %v1980
      %v2098 = vmul.f32 %v1045, %v1981
      %v2099 = vmul.f32 %v1046, %v1982
      %v2100 = vmul.f32 %v1047, %v1983
      %v2101 = vmul.f32 %v1048, %v1984
      %v2102 = vmul.f32 %v1049, %v1985
      %v2103 = vmul.f32 %v1050, %v1986
      %v2104 = vmul.f32 %v1051, %v1987
      %v2105 = vmul.f32 %v1052, %v1988
      %v2106 = vmul.f32 %v1053, %v1989
      %v2107 = vmul.f32 %v1054, %v1990
      %v2108 = vmul.f32 %v1055, %v1991
      %v2109 = vmul.f32 %v1056, %v1992
      %v2110 = vmul.f32 %v1057, %v1993
      %v2111 = vmul.f32 %v1058, %v1994
      %v2112 = vmul.f32 %v1059, %v1995
      %v2113 = vmul.f32 %v1060, %v1996
      %v2114 = vmul.f32 %v1061, %v1997
      %v2115 = vmul.f32 %v1062, %v1998
      %v2116 = vmul.f32 %v1063, %v1999
      %v2117 = vmul.f32 %v1064, %v2000
      %v2118 = vmul.f32 %v1065, %v2001
      %v2119 = vmul.f32 %v1066, %v2002
      %v2120 = vmul.f32 %v1067, %v2003
      %v2121 = vmul.f32 %v1068, %v2004
      %v2122 = vmul.f32 %v1069, %v2005
      %v2123 = vmul.f32 %v1070, %v2006
      %v2124 = vmul.f32 %v1071, %v2007
      %v2125 = vmul.f32 %v1072, %v2008
      %v2126 = vmul.f32 %v1073, %v2009
      %v2127 = vmul.f32 %v1074, %v2010
      %v2128 = vmul.f32 %v1075, %v2011
      %v2129 = vmul.f32 %v1076, %v2012
      %v2130 = vmul.f32 %v1077, %v2013
      %v2131 = vmul.f32 %v1078, %v2014
      %v2132 = vmul.f32 %v1079, %v2015
      %v2133 = vmul.f32 %v1080, %v2016
      %v2134 = vmul.f32 %v1081, %v2017
      %v2135 = vmul.f32 %v1082, %v2018
      %v2136 = vmul.f32 %v1083, %v2019
      %v2137 = vmul.f32 %v1084, %v2020
      %v2138 = vmul.f32 %v1085, %v2021
      %v2139 = vmul.f32 %v1086, %v2022
      %v2140 = vmul.f32 %v1087, %v2023
      %v2141 = vmul.f32 %v1088, %v2024
      %v2142 = vmul.f32 %v1089, %v2025
      %v2143 = vmul.f32 %v1090, %v2026
      %v2144 = vmul.f32 %v1091, %v2027
      %v2145 = vmul.f32 %v1092, %v2028
      %v2146 = vmul.f32 %v1093, %v2029
      %v2147 = vmul.f32 %v1094, %v2030
      %v2148 = vmul.f32 %v1095, %v2031
      %v2149 = vmul.f32 %v1096, %v2032
      %v2150 = vmul.f32 %v1097, %v2033
      %v2151 = vmul.f32 %v1098, %v2034
      %v2152 = vmul.f32 %v1099, %v2035
      %v2153 = vmul.f32 %v1100, %v2036
      %v2154 = vmul.f32 %v1101, %v2037
      %v2155 = vmul.f32 %v1102, %v2038
      %v2156 = vmul.f32 %v1103, %v2039
      %v2157 = vmul.f32 %v1104, %v2040
      %v2158 = vmul.f32 %v1105, %v2041
      %v2159 = vmul.f32 %v1106, %v2042
      %v2160 = vmul.f32 %v1107, %v2043
      %v2161 = vmul.f32 %v1108, %v2044
      %v2162 = vmul.f32 %v1109, %v2045
      %v2163 = vmul.f32 %v1110, %v2046
      %v2164 = vmul.f32 %v1111, %v2047
      %v2165 = vmul.f32 %v1112, %v2048
      %v2166 = vmul.f32 %v1113, %v2049
      %v2167 = vmul.f32 %v1114, %v2050
      %v2168 = vmul.f32 %v1115, %v2051
      %v2169 = vmul.f32 %v1116, %v2052
      %v2170 = vmul.f32 %v1117, %v2053
      %v2171 = vmul.f32 %v1118, %v2054
      %v2172 = vmul.f32 %v1119, %v2055
      %v2173 = vmul.f32 %v1120, %v2056
      %v2174 = vmul.f32 %v1121, %v2057
      %v2175 = vmul.f32 %v1122, %v2058
      %v2176 = vmul.f32 %v1123, %v2059
      %v2177 = vmul.f32 %v1124, %v2060
      %v2178 = vmul.f32 %v1125, %v2061
      %v2179 = vmul.f32 %v1126, %v2062
      %v2180 = vmul.f32 %v1127, %v2063
      %v2181 = vmul.f32 %v1128, %v2064
      %v2182 = vmul.f32 %v1129, %v2065
      %v2183 = vadd.f32 %v2066, %v2067
      %v2184 = vadd.f32 %v2183, %v2068
      %v2185 = vadd.f32 %v2184, %v2069
      %v2186 = vadd.f32 %v2185, %v2070
      %v2187 = vadd.f32 %v2186, %v2071
      %v2188 = vadd.f32 %v2187, %v2072
      %v2189 = vadd.f32 %v2188, %v2073
      %v2190 = vsel %vm437, %v2074, 0.0
      %v2191 = vadd.f32 %v2189, %v2190
      %2192 = vadd.xlane.f32.xlu0 %v2191
      %v2193 = vpop.xlane.xlu0 %2192
      %v2194 = vadd.f32 %v2075, %v2076
      %v2195 = vadd.f32 %v2194, %v2077
      %v2196 = vadd.f32 %v2195, %v2078
      %v2197 = vadd.f32 %v2196, %v2079
      %v2198 = vadd.f32 %v2197, %v2080
      %v2199 = vadd.f32 %v2198, %v2081
      %v2200 = vadd.f32 %v2199, %v2082
      %v2201 = vsel %vm437, %v2083, 0.0
      %v2202 = vadd.f32 %v2200, %v2201
      %2203 = vadd.xlane.f32.xlu0 %v2202
      %v2204 = vpop.xlane.xlu0 %2203
      %v2205 = vadd.f32 %v2084, %v2085
      %v2206 = vadd.f32 %v2205, %v2086
      %v2207 = vadd.f32 %v2206, %v2087
      %v2208 = vadd.f32 %v2207, %v2088
      %v2209 = vadd.f32 %v2208, %v2089
      %v2210 = vadd.f32 %v2209, %v2090
      %v2211 = vadd.f32 %v2210, %v2091
      %v2212 = vsel %vm437, %v2092, 0.0
      %v2213 = vadd.f32 %v2211, %v2212
      %2214 = vadd.xlane.f32.xlu0 %v2213
      %v2215 = vpop.xlane.xlu0 %2214
      %v2216 = vadd.f32 %v2093, %v2094
      %v2217 = vadd.f32 %v2216, %v2095
      %v2218 = vadd.f32 %v2217, %v2096
      %v2219 = vadd.f32 %v2218, %v2097
      %v2220 = vadd.f32 %v2219, %v2098
      %v2221 = vadd.f32 %v2220, %v2099
      %v2222 = vadd.f32 %v2221, %v2100
      %v2223 = vsel %vm437, %v2101, 0.0
      %v2224 = vadd.f32 %v2222, %v2223
      %2225 = vadd.xlane.f32.xlu0 %v2224
      %v2226 = vpop.xlane.xlu0 %2225
      %v2227 = vadd.f32 %v2102, %v2103
      %v2228 = vadd.f32 %v2227, %v2104
      %v2229 = vadd.f32 %v2228, %v2105
      %v2230 = vadd.f32 %v2229, %v2106
      %v2231 = vadd.f32 %v2230, %v2107
      %v2232 = vadd.f32 %v2231, %v2108
      %v2233 = vadd.f32 %v2232, %v2109
      %v2234 = vsel %vm437, %v2110, 0.0
      %v2235 = vadd.f32 %v2233, %v2234
      %2236 = vadd.xlane.f32.xlu0 %v2235
      %v2237 = vpop.xlane.xlu0 %2236
      %v2238 = vadd.f32 %v2111, %v2112
      %v2239 = vadd.f32 %v2238, %v2113
      %v2240 = vadd.f32 %v2239, %v2114
      %v2241 = vadd.f32 %v2240, %v2115
      %v2242 = vadd.f32 %v2241, %v2116
      %v2243 = vadd.f32 %v2242, %v2117
      %v2244 = vadd.f32 %v2243, %v2118
      %v2245 = vsel %vm437, %v2119, 0.0
      %v2246 = vadd.f32 %v2244, %v2245
      %2247 = vadd.xlane.f32.xlu0 %v2246
      %v2248 = vpop.xlane.xlu0 %2247
      %v2249 = vadd.f32 %v2120, %v2121
      %v2250 = vadd.f32 %v2249, %v2122
      %v2251 = vadd.f32 %v2250, %v2123
      %v2252 = vadd.f32 %v2251, %v2124
      %v2253 = vadd.f32 %v2252, %v2125
      %v2254 = vadd.f32 %v2253, %v2126
      %v2255 = vadd.f32 %v2254, %v2127
      %v2256 = vsel %vm437, %v2128, 0.0
      %v2257 = vadd.f32 %v2255, %v2256
      %2258 = vadd.xlane.f32.xlu0 %v2257
      %v2259 = vpop.xlane.xlu0 %2258
      %v2260 = vadd.f32 %v2129, %v2130
      %v2261 = vadd.f32 %v2260, %v2131
      %v2262 = vadd.f32 %v2261, %v2132
      %v2263 = vadd.f32 %v2262, %v2133
      %v2264 = vadd.f32 %v2263, %v2134
      %v2265 = vadd.f32 %v2264, %v2135
      %v2266 = vadd.f32 %v2265, %v2136
      %v2267 = vsel %vm437, %v2137, 0.0
      %v2268 = vadd.f32 %v2266, %v2267
      %2269 = vadd.xlane.f32.xlu0 %v2268
      %v2270 = vpop.xlane.xlu0 %2269
      %v2271 = vadd.f32 %v2138, %v2139
      %v2272 = vadd.f32 %v2271, %v2140
      %v2273 = vadd.f32 %v2272, %v2141
      %v2274 = vadd.f32 %v2273, %v2142
      %v2275 = vadd.f32 %v2274, %v2143
      %v2276 = vadd.f32 %v2275, %v2144
      %v2277 = vadd.f32 %v2276, %v2145
      %v2278 = vsel %vm437, %v2146, 0.0
      %v2279 = vadd.f32 %v2277, %v2278
      %2280 = vadd.xlane.f32.xlu0 %v2279
      %v2281 = vpop.xlane.xlu0 %2280
      %v2282 = vadd.f32 %v2147, %v2148
      %v2283 = vadd.f32 %v2282, %v2149
      %v2284 = vadd.f32 %v2283, %v2150
      %v2285 = vadd.f32 %v2284, %v2151
      %v2286 = vadd.f32 %v2285, %v2152
      %v2287 = vadd.f32 %v2286, %v2153
      %v2288 = vadd.f32 %v2287, %v2154
      %v2289 = vsel %vm437, %v2155, 0.0
      %v2290 = vadd.f32 %v2288, %v2289
      %2291 = vadd.xlane.f32.xlu0 %v2290
      %v2292 = vpop.xlane.xlu0 %2291
      %v2293 = vadd.f32 %v2156, %v2157
      %v2294 = vadd.f32 %v2293, %v2158
      %v2295 = vadd.f32 %v2294, %v2159
      %v2296 = vadd.f32 %v2295, %v2160
      %v2297 = vadd.f32 %v2296, %v2161
      %v2298 = vadd.f32 %v2297, %v2162
      %v2299 = vadd.f32 %v2298, %v2163
      %v2300 = vsel %vm437, %v2164, 0.0
      %v2301 = vadd.f32 %v2299, %v2300
      %2302 = vadd.xlane.f32.xlu0 %v2301
      %v2303 = vpop.xlane.xlu0 %2302
      %v2304 = vadd.f32 %v2165, %v2166
      %v2305 = vadd.f32 %v2304, %v2167
      %v2306 = vadd.f32 %v2305, %v2168
      %v2307 = vadd.f32 %v2306, %v2169
      %v2308 = vadd.f32 %v2307, %v2170
      %v2309 = vadd.f32 %v2308, %v2171
      %v2310 = vadd.f32 %v2309, %v2172
      %v2311 = vsel %vm437, %v2173, 0.0
      %v2312 = vadd.f32 %v2310, %v2311
      %2313 = vadd.xlane.f32.xlu0 %v2312
      %v2314 = vpop.xlane.xlu0 %2313
      %v2315 = vsel %vm295, %v2174, 0.0
      %v2316 = vsel %vm295, %v2175, 0.0
      %v2317 = vadd.f32 %v2315, %v2316
      %v2318 = vsel %vm295, %v2176, 0.0
      %v2319 = vadd.f32 %v2317, %v2318
      %v2320 = vsel %vm295, %v2177, 0.0
      %v2321 = vadd.f32 %v2319, %v2320
      %v2322 = vsel %vm295, %v2178, 0.0
      %v2323 = vadd.f32 %v2321, %v2322
      %v2324 = vsel %vm295, %v2179, 0.0
      %v2325 = vadd.f32 %v2323, %v2324
      %v2326 = vsel %vm295, %v2180, 0.0
      %v2327 = vadd.f32 %v2325, %v2326
      %v2328 = vsel %vm295, %v2181, 0.0
      %v2329 = vadd.f32 %v2327, %v2328
      %v2330 = vsel %vm461, %v2182, 0.0
      %v2331 = vadd.f32 %v2329, %v2330
      %2332 = vadd.xlane.f32.xlu0 %v2331
      %v2333 = vpop.xlane.xlu0 %2332
      %v2334 = vadd.f32 %v2193, %v2204
      %v2335 = vadd.f32 %v2334, %v2215
      %v2336 = vadd.f32 %v2335, %v2226
      %v2337 = vadd.f32 %v2336, %v2237
      %v2338 = vadd.f32 %v2337, %v2248
      %v2339 = vadd.f32 %v2338, %v2259
      %v2340 = vadd.f32 %v2339, %v2270
      %v2341 = vadd.f32 %v2340, %v2281
      %v2342 = vadd.f32 %v2341, %v2292
      %v2343 = vadd.f32 %v2342, %v2303
      %v2344 = vadd.f32 %v2343, %v2314
      %v2345 = vsel %vm295, %v2333, 0.0
      %v2346 = vadd.f32 %v2344, %v2345
      %v2347 = vrot.slane %v2346, 4
      %v2348 = vadd.f32 %v2346, %v2347
      %v2349 = vrot.slane %v2348, 2
      %v2350 = vadd.f32 %v2348, %v2349
      %v2351 = vrot.slane %v2350, 1
      %v2352 = vadd.f32 %v2350, %v2351
      %vm2353 = vcmp.eq.s32.totalorder %v1131, 2
      %v2354 = vsel %vm2353, %v2352, 0.0
      %v2355 = vadd.f32 %v1947, %v2354
      %s2356 = scalar_lea.vmem %s1, 2808
      %v2357 = vld [vmem:[%s2356] sm:$0xff]
      %v2358 = vld [vmem:[%s2356 + $0x8] sm:$0xff]
      %v2359 = vld [vmem:[%s2356 + $0x10] sm:$0xff]
      %v2360 = vld [vmem:[%s2356 + $0x18] sm:$0xff]
      %v2361 = vld [vmem:[%s2356 + $0x20] sm:$0xff]
      %v2362 = vld [vmem:[%s2356 + $0x28] sm:$0xff]
      %v2363 = vld [vmem:[%s2356 + $0x30] sm:$0xff]
      %v2364 = vld [vmem:[%s2356 + $0x38] sm:$0xff]
      %v2365 = vld [vmem:[%s2356 + $0x40] sm:$0xff]
      %v2366 = vld [vmem:[%s2356 + $0x48] sm:$0xff]
      %v2367 = vld [vmem:[%s2356 + $0x50] sm:$0xff]
      %v2368 = vld [vmem:[%s2356 + $0x58] sm:$0xff]
      %v2369 = vld [vmem:[%s2356 + $0x60] sm:$0xff]
      %v2370 = vld [vmem:[%s2356 + $0x68] sm:$0xff]
      %v2371 = vld [vmem:[%s2356 + $0x70] sm:$0xff]
      %v2372 = vld [vmem:[%s2356 + $0x78] sm:$0xff]
      %v2373 = vld [vmem:[%s2356 + $0x80] sm:$0xff]
      %v2374 = vld [vmem:[%s2356 + $0x88] sm:$0xff]
      %v2375 = vld [vmem:[%s2356 + $0x90] sm:$0xff]
      %v2376 = vld [vmem:[%s2356 + $0x98] sm:$0xff]
      %v2377 = vld [vmem:[%s2356 + $0xa0] sm:$0xff]
      %v2378 = vld [vmem:[%s2356 + $0xa8] sm:$0xff]
      %v2379 = vld [vmem:[%s2356 + $0xb0] sm:$0xff]
      %v2380 = vld [vmem:[%s2356 + $0xb8] sm:$0xff]
      %v2381 = vld [vmem:[%s2356 + $0xc0] sm:$0xff]
      %v2382 = vld [vmem:[%s2356 + $0xc8] sm:$0xff]
      %v2383 = vld [vmem:[%s2356 + $0xd0] sm:$0xff]
      %v2384 = vld [vmem:[%s2356 + $0xd8] sm:$0xff]
      %v2385 = vld [vmem:[%s2356 + $0xe0] sm:$0xff]
      %v2386 = vld [vmem:[%s2356 + $0xe8] sm:$0xff]
      %v2387 = vld [vmem:[%s2356 + $0xf0] sm:$0xff]
      %v2388 = vld [vmem:[%s2356 + $0xf8] sm:$0xff]
      %v2389 = vld [vmem:[%s2356 + $0x100] sm:$0xff]
      %v2390 = vld [vmem:[%s2356 + $0x108] sm:$0xff]
      %v2391 = vld [vmem:[%s2356 + $0x110] sm:$0xff]
      %v2392 = vld [vmem:[%s2356 + $0x118] sm:$0xff]
      %v2393 = vld [vmem:[%s2356 + $0x120] sm:$0xff]
      %v2394 = vld [vmem:[%s2356 + $0x128] sm:$0xff]
      %v2395 = vld [vmem:[%s2356 + $0x130] sm:$0xff]
      %v2396 = vld [vmem:[%s2356 + $0x138] sm:$0xff]
      %v2397 = vld [vmem:[%s2356 + $0x140] sm:$0xff]
      %v2398 = vld [vmem:[%s2356 + $0x148] sm:$0xff]
      %v2399 = vld [vmem:[%s2356 + $0x150] sm:$0xff]
      %v2400 = vld [vmem:[%s2356 + $0x158] sm:$0xff]
      %v2401 = vld [vmem:[%s2356 + $0x160] sm:$0xff]
      %v2402 = vld [vmem:[%s2356 + $0x168] sm:$0xff]
      %v2403 = vld [vmem:[%s2356 + $0x170] sm:$0xff]
      %v2404 = vld [vmem:[%s2356 + $0x178] sm:$0xff]
      %v2405 = vld [vmem:[%s2356 + $0x180] sm:$0xff]
      %v2406 = vld [vmem:[%s2356 + $0x188] sm:$0xff]
      %v2407 = vld [vmem:[%s2356 + $0x190] sm:$0xff]
      %v2408 = vld [vmem:[%s2356 + $0x198] sm:$0xff]
      %v2409 = vld [vmem:[%s2356 + $0x1a0] sm:$0xff]
      %v2410 = vld [vmem:[%s2356 + $0x1a8] sm:$0xff]
      %v2411 = vld [vmem:[%s2356 + $0x1b0] sm:$0xff]
      %v2412 = vld [vmem:[%s2356 + $0x1b8] sm:$0xff]
      %v2413 = vld [vmem:[%s2356 + $0x1c0] sm:$0xff]
      %v2414 = vld [vmem:[%s2356 + $0x1c8] sm:$0xff]
      %v2415 = vld [vmem:[%s2356 + $0x1d0] sm:$0xff]
      %v2416 = vld [vmem:[%s2356 + $0x1d8] sm:$0xff]
      %v2417 = vld [vmem:[%s2356 + $0x1e0] sm:$0xff]
      %v2418 = vld [vmem:[%s2356 + $0x1e8] sm:$0xff]
      %v2419 = vld [vmem:[%s2356 + $0x1f0] sm:$0xff]
      %v2420 = vld [vmem:[%s2356 + $0x1f8] sm:$0xff]
      %v2421 = vld [vmem:[%s2356 + $0x200] sm:$0xff]
      %v2422 = vld [vmem:[%s2356 + $0x208] sm:$0xff]
      %v2423 = vld [vmem:[%s2356 + $0x210] sm:$0xff]
      %v2424 = vld [vmem:[%s2356 + $0x218] sm:$0xff]
      %v2425 = vld [vmem:[%s2356 + $0x220] sm:$0xff]
      %v2426 = vld [vmem:[%s2356 + $0x228] sm:$0xff]
      %v2427 = vld [vmem:[%s2356 + $0x230] sm:$0xff]
      %v2428 = vld [vmem:[%s2356 + $0x238] sm:$0xff]
      %v2429 = vld [vmem:[%s2356 + $0x240] sm:$0xff]
      %v2430 = vld [vmem:[%s2356 + $0x248] sm:$0xff]
      %v2431 = vld [vmem:[%s2356 + $0x250] sm:$0xff]
      %v2432 = vld [vmem:[%s2356 + $0x258] sm:$0xff]
      %v2433 = vld [vmem:[%s2356 + $0x260] sm:$0xff]
      %v2434 = vld [vmem:[%s2356 + $0x268] sm:$0xff]
      %v2435 = vld [vmem:[%s2356 + $0x270] sm:$0xff]
      %v2436 = vld [vmem:[%s2356 + $0x278] sm:$0xff]
      %v2437 = vld [vmem:[%s2356 + $0x280] sm:$0xff]
      %v2438 = vld [vmem:[%s2356 + $0x288] sm:$0xff]
      %v2439 = vld [vmem:[%s2356 + $0x290] sm:$0xff]
      %v2440 = vld [vmem:[%s2356 + $0x298] sm:$0xff]
      %v2441 = vld [vmem:[%s2356 + $0x2a0] sm:$0xff]
      %v2442 = vld [vmem:[%s2356 + $0x2a8] sm:$0xff]
      %v2443 = vld [vmem:[%s2356 + $0x2b0] sm:$0xff]
      %v2444 = vld [vmem:[%s2356 + $0x2b8] sm:$0xff]
      %v2445 = vld [vmem:[%s2356 + $0x2c0] sm:$0xff]
      %v2446 = vld [vmem:[%s2356 + $0x2c8] sm:$0xff]
      %v2447 = vld [vmem:[%s2356 + $0x2d0] sm:$0xff]
      %v2448 = vld [vmem:[%s2356 + $0x2d8] sm:$0xff]
      %v2449 = vld [vmem:[%s2356 + $0x2e0] sm:$0xff]
      %v2450 = vld [vmem:[%s2356 + $0x2e8] sm:$0xff]
      %v2451 = vld [vmem:[%s2356 + $0x2f0] sm:$0xff]
      %v2452 = vld [vmem:[%s2356 + $0x2f8] sm:$0xff]
      %v2453 = vld [vmem:[%s2356 + $0x300] sm:$0xff]
      %v2454 = vld [vmem:[%s2356 + $0x308] sm:$0xff]
      %v2455 = vld [vmem:[%s2356 + $0x310] sm:$0xff]
      %v2456 = vld [vmem:[%s2356 + $0x318] sm:$0xff]
      %v2457 = vld [vmem:[%s2356 + $0x320] sm:$0xff]
      %v2458 = vld [vmem:[%s2356 + $0x328] sm:$0xff]
      %v2459 = vld [vmem:[%s2356 + $0x330] sm:$0xff]
      %v2460 = vld [vmem:[%s2356 + $0x338] sm:$0xff]
      %v2461 = vld [vmem:[%s2356 + $0x340] sm:$0xff]
      %v2462 = vld [vmem:[%s2356 + $0x348] sm:$0xff]
      %v2463 = vld [vmem:[%s2356 + $0x350] sm:$0xff]
      %v2464 = vld [vmem:[%s2356 + $0x358] sm:$0xff]
      %v2465 = vld [vmem:[%s2356 + $0x360] sm:$0xf]
      %v2466 = vld [vmem:[%s2356 + $0x368] sm:$0xf]
      %v2467 = vld [vmem:[%s2356 + $0x370] sm:$0xf]
      %v2468 = vld [vmem:[%s2356 + $0x378] sm:$0xf]
      %v2469 = vld [vmem:[%s2356 + $0x380] sm:$0xf]
      %v2470 = vld [vmem:[%s2356 + $0x388] sm:$0xf]
      %v2471 = vld [vmem:[%s2356 + $0x390] sm:$0xf]
      %v2472 = vld [vmem:[%s2356 + $0x398] sm:$0xf]
      %v2473 = vld [vmem:[%s2356 + $0x3a0] sm:$0xf]
      %v2474 = vmul.f32 %v1005, %v2357
      %v2475 = vmul.f32 %v1007, %v2358
      %v2476 = vmul.f32 %v1009, %v2359
      %v2477 = vmul.f32 %v1011, %v2360
      %v2478 = vmul.f32 %v1013, %v2361
      %v2479 = vmul.f32 %v1015, %v2362
      %v2480 = vmul.f32 %v1017, %v2363
      %v2481 = vmul.f32 %v1019, %v2364
      %v2482 = vmul.f32 %v1021, %v2365
      %v2483 = vmul.f32 %v1022, %v2366
      %v2484 = vmul.f32 %v1023, %v2367
      %v2485 = vmul.f32 %v1024, %v2368
      %v2486 = vmul.f32 %v1025, %v2369
      %v2487 = vmul.f32 %v1026, %v2370
      %v2488 = vmul.f32 %v1027, %v2371
      %v2489 = vmul.f32 %v1028, %v2372
      %v2490 = vmul.f32 %v1029, %v2373
      %v2491 = vmul.f32 %v1030, %v2374
      %v2492 = vmul.f32 %v1031, %v2375
      %v2493 = vmul.f32 %v1032, %v2376
      %v2494 = vmul.f32 %v1033, %v2377
      %v2495 = vmul.f32 %v1034, %v2378
      %v2496 = vmul.f32 %v1035, %v2379
      %v2497 = vmul.f32 %v1036, %v2380
      %v2498 = vmul.f32 %v1037, %v2381
      %v2499 = vmul.f32 %v1038, %v2382
      %v2500 = vmul.f32 %v1039, %v2383
      %v2501 = vmul.f32 %v1040, %v2384
      %v2502 = vmul.f32 %v1041, %v2385
      %v2503 = vmul.f32 %v1042, %v2386
      %v2504 = vmul.f32 %v1043, %v2387
      %v2505 = vmul.f32 %v1044, %v2388
      %v2506 = vmul.f32 %v1045, %v2389
      %v2507 = vmul.f32 %v1046, %v2390
      %v2508 = vmul.f32 %v1047, %v2391
      %v2509 = vmul.f32 %v1048, %v2392
      %v2510 = vmul.f32 %v1049, %v2393
      %v2511 = vmul.f32 %v1050, %v2394
      %v2512 = vmul.f32 %v1051, %v2395
      %v2513 = vmul.f32 %v1052, %v2396
      %v2514 = vmul.f32 %v1053, %v2397
      %v2515 = vmul.f32 %v1054, %v2398
      %v2516 = vmul.f32 %v1055, %v2399
      %v2517 = vmul.f32 %v1056, %v2400
      %v2518 = vmul.f32 %v1057, %v2401
      %v2519 = vmul.f32 %v1058, %v2402
      %v2520 = vmul.f32 %v1059, %v2403
      %v2521 = vmul.f32 %v1060, %v2404
      %v2522 = vmul.f32 %v1061, %v2405
      %v2523 = vmul.f32 %v1062, %v2406
      %v2524 = vmul.f32 %v1063, %v2407
      %v2525 = vmul.f32 %v1064, %v2408
      %v2526 = vmul.f32 %v1065, %v2409
      %v2527 = vmul.f32 %v1066, %v2410
      %v2528 = vmul.f32 %v1067, %v2411
      %v2529 = vmul.f32 %v1068, %v2412
      %v2530 = vmul.f32 %v1069, %v2413
      %v2531 = vmul.f32 %v1070, %v2414
      %v2532 = vmul.f32 %v1071, %v2415
      %v2533 = vmul.f32 %v1072, %v2416
      %v2534 = vmul.f32 %v1073, %v2417
      %v2535 = vmul.f32 %v1074, %v2418
      %v2536 = vmul.f32 %v1075, %v2419
      %v2537 = vmul.f32 %v1076, %v2420
      %v2538 = vmul.f32 %v1077, %v2421
      %v2539 = vmul.f32 %v1078, %v2422
      %v2540 = vmul.f32 %v1079, %v2423
      %v2541 = vmul.f32 %v1080, %v2424
      %v2542 = vmul.f32 %v1081, %v2425
      %v2543 = vmul.f32 %v1082, %v2426
      %v2544 = vmul.f32 %v1083, %v2427
      %v2545 = vmul.f32 %v1084, %v2428
      %v2546 = vmul.f32 %v1085, %v2429
      %v2547 = vmul.f32 %v1086, %v2430
      %v2548 = vmul.f32 %v1087, %v2431
      %v2549 = vmul.f32 %v1088, %v2432
      %v2550 = vmul.f32 %v1089, %v2433
      %v2551 = vmul.f32 %v1090, %v2434
      %v2552 = vmul.f32 %v1091, %v2435
      %v2553 = vmul.f32 %v1092, %v2436
      %v2554 = vmul.f32 %v1093, %v2437
      %v2555 = vmul.f32 %v1094, %v2438
      %v2556 = vmul.f32 %v1095, %v2439
      %v2557 = vmul.f32 %v1096, %v2440
      %v2558 = vmul.f32 %v1097, %v2441
      %v2559 = vmul.f32 %v1098, %v2442
      %v2560 = vmul.f32 %v1099, %v2443
      %v2561 = vmul.f32 %v1100, %v2444
      %v2562 = vmul.f32 %v1101, %v2445
      %v2563 = vmul.f32 %v1102, %v2446
      %v2564 = vmul.f32 %v1103, %v2447
      %v2565 = vmul.f32 %v1104, %v2448
      %v2566 = vmul.f32 %v1105, %v2449
      %v2567 = vmul.f32 %v1106, %v2450
      %v2568 = vmul.f32 %v1107, %v2451
      %v2569 = vmul.f32 %v1108, %v2452
      %v2570 = vmul.f32 %v1109, %v2453
      %v2571 = vmul.f32 %v1110, %v2454
      %v2572 = vmul.f32 %v1111, %v2455
      %v2573 = vmul.f32 %v1112, %v2456
      %v2574 = vmul.f32 %v1113, %v2457
      %v2575 = vmul.f32 %v1114, %v2458
      %v2576 = vmul.f32 %v1115, %v2459
      %v2577 = vmul.f32 %v1116, %v2460
      %v2578 = vmul.f32 %v1117, %v2461
      %v2579 = vmul.f32 %v1118, %v2462
      %v2580 = vmul.f32 %v1119, %v2463
      %v2581 = vmul.f32 %v1120, %v2464
      %v2582 = vmul.f32 %v1121, %v2465
      %v2583 = vmul.f32 %v1122, %v2466
      %v2584 = vmul.f32 %v1123, %v2467
      %v2585 = vmul.f32 %v1124, %v2468
      %v2586 = vmul.f32 %v1125, %v2469
      %v2587 = vmul.f32 %v1126, %v2470
      %v2588 = vmul.f32 %v1127, %v2471
      %v2589 = vmul.f32 %v1128, %v2472
      %v2590 = vmul.f32 %v1129, %v2473
      %v2591 = vadd.f32 %v2474, %v2475
      %v2592 = vadd.f32 %v2591, %v2476
      %v2593 = vadd.f32 %v2592, %v2477
      %v2594 = vadd.f32 %v2593, %v2478
      %v2595 = vadd.f32 %v2594, %v2479
      %v2596 = vadd.f32 %v2595, %v2480
      %v2597 = vadd.f32 %v2596, %v2481
      %v2598 = vsel %vm437, %v2482, 0.0
      %v2599 = vadd.f32 %v2597, %v2598
      %2600 = vadd.xlane.f32.xlu0 %v2599
      %v2601 = vpop.xlane.xlu0 %2600
      %v2602 = vadd.f32 %v2483, %v2484
      %v2603 = vadd.f32 %v2602, %v2485
      %v2604 = vadd.f32 %v2603, %v2486
      %v2605 = vadd.f32 %v2604, %v2487
      %v2606 = vadd.f32 %v2605, %v2488
      %v2607 = vadd.f32 %v2606, %v2489
      %v2608 = vadd.f32 %v2607, %v2490
      %v2609 = vsel %vm437, %v2491, 0.0
      %v2610 = vadd.f32 %v2608, %v2609
      %2611 = vadd.xlane.f32.xlu0 %v2610
      %v2612 = vpop.xlane.xlu0 %2611
      %v2613 = vadd.f32 %v2492, %v2493
      %v2614 = vadd.f32 %v2613, %v2494
      %v2615 = vadd.f32 %v2614, %v2495
      %v2616 = vadd.f32 %v2615, %v2496
      %v2617 = vadd.f32 %v2616, %v2497
      %v2618 = vadd.f32 %v2617, %v2498
      %v2619 = vadd.f32 %v2618, %v2499
      %v2620 = vsel %vm437, %v2500, 0.0
      %v2621 = vadd.f32 %v2619, %v2620
      %2622 = vadd.xlane.f32.xlu0 %v2621
      %v2623 = vpop.xlane.xlu0 %2622
      %v2624 = vadd.f32 %v2501, %v2502
      %v2625 = vadd.f32 %v2624, %v2503
      %v2626 = vadd.f32 %v2625, %v2504
      %v2627 = vadd.f32 %v2626, %v2505
      %v2628 = vadd.f32 %v2627, %v2506
      %v2629 = vadd.f32 %v2628, %v2507
      %v2630 = vadd.f32 %v2629, %v2508
      %v2631 = vsel %vm437, %v2509, 0.0
      %v2632 = vadd.f32 %v2630, %v2631
      %2633 = vadd.xlane.f32.xlu0 %v2632
      %v2634 = vpop.xlane.xlu0 %2633
      %v2635 = vadd.f32 %v2510, %v2511
      %v2636 = vadd.f32 %v2635, %v2512
      %v2637 = vadd.f32 %v2636, %v2513
      %v2638 = vadd.f32 %v2637, %v2514
      %v2639 = vadd.f32 %v2638, %v2515
      %v2640 = vadd.f32 %v2639, %v2516
      %v2641 = vadd.f32 %v2640, %v2517
      %v2642 = vsel %vm437, %v2518, 0.0
      %v2643 = vadd.f32 %v2641, %v2642
      %2644 = vadd.xlane.f32.xlu0 %v2643
      %v2645 = vpop.xlane.xlu0 %2644
      %v2646 = vadd.f32 %v2519, %v2520
      %v2647 = vadd.f32 %v2646, %v2521
      %v2648 = vadd.f32 %v2647, %v2522
      %v2649 = vadd.f32 %v2648, %v2523
      %v2650 = vadd.f32 %v2649, %v2524
      %v2651 = vadd.f32 %v2650, %v2525
      %v2652 = vadd.f32 %v2651, %v2526
      %v2653 = vsel %vm437, %v2527, 0.0
      %v2654 = vadd.f32 %v2652, %v2653
      %2655 = vadd.xlane.f32.xlu0 %v2654
      %v2656 = vpop.xlane.xlu0 %2655
      %v2657 = vadd.f32 %v2528, %v2529
      %v2658 = vadd.f32 %v2657, %v2530
      %v2659 = vadd.f32 %v2658, %v2531
      %v2660 = vadd.f32 %v2659, %v2532
      %v2661 = vadd.f32 %v2660, %v2533
      %v2662 = vadd.f32 %v2661, %v2534
      %v2663 = vadd.f32 %v2662, %v2535
      %v2664 = vsel %vm437, %v2536, 0.0
      %v2665 = vadd.f32 %v2663, %v2664
      %2666 = vadd.xlane.f32.xlu0 %v2665
      %v2667 = vpop.xlane.xlu0 %2666
      %v2668 = vadd.f32 %v2537, %v2538
      %v2669 = vadd.f32 %v2668, %v2539
      %v2670 = vadd.f32 %v2669, %v2540
      %v2671 = vadd.f32 %v2670, %v2541
      %v2672 = vadd.f32 %v2671, %v2542
      %v2673 = vadd.f32 %v2672, %v2543
      %v2674 = vadd.f32 %v2673, %v2544
      %v2675 = vsel %vm437, %v2545, 0.0
      %v2676 = vadd.f32 %v2674, %v2675
      %2677 = vadd.xlane.f32.xlu0 %v2676
      %v2678 = vpop.xlane.xlu0 %2677
      %v2679 = vadd.f32 %v2546, %v2547
      %v2680 = vadd.f32 %v2679, %v2548
      %v2681 = vadd.f32 %v2680, %v2549
      %v2682 = vadd.f32 %v2681, %v2550
      %v2683 = vadd.f32 %v2682, %v2551
      %v2684 = vadd.f32 %v2683, %v2552
      %v2685 = vadd.f32 %v2684, %v2553
      %v2686 = vsel %vm437, %v2554, 0.0
      %v2687 = vadd.f32 %v2685, %v2686
      %2688 = vadd.xlane.f32.xlu0 %v2687
      %v2689 = vpop.xlane.xlu0 %2688
      %v2690 = vadd.f32 %v2555, %v2556
      %v2691 = vadd.f32 %v2690, %v2557
      %v2692 = vadd.f32 %v2691, %v2558
      %v2693 = vadd.f32 %v2692, %v2559
      %v2694 = vadd.f32 %v2693, %v2560
      %v2695 = vadd.f32 %v2694, %v2561
      %v2696 = vadd.f32 %v2695, %v2562
      %v2697 = vsel %vm437, %v2563, 0.0
      %v2698 = vadd.f32 %v2696, %v2697
      %2699 = vadd.xlane.f32.xlu0 %v2698
      %v2700 = vpop.xlane.xlu0 %2699
      %v2701 = vadd.f32 %v2564, %v2565
      %v2702 = vadd.f32 %v2701, %v2566
      %v2703 = vadd.f32 %v2702, %v2567
      %v2704 = vadd.f32 %v2703, %v2568
      %v2705 = vadd.f32 %v2704, %v2569
      %v2706 = vadd.f32 %v2705, %v2570
      %v2707 = vadd.f32 %v2706, %v2571
      %v2708 = vsel %vm437, %v2572, 0.0
      %v2709 = vadd.f32 %v2707, %v2708
      %2710 = vadd.xlane.f32.xlu0 %v2709
      %v2711 = vpop.xlane.xlu0 %2710
      %v2712 = vadd.f32 %v2573, %v2574
      %v2713 = vadd.f32 %v2712, %v2575
      %v2714 = vadd.f32 %v2713, %v2576
      %v2715 = vadd.f32 %v2714, %v2577
      %v2716 = vadd.f32 %v2715, %v2578
      %v2717 = vadd.f32 %v2716, %v2579
      %v2718 = vadd.f32 %v2717, %v2580
      %v2719 = vsel %vm437, %v2581, 0.0
      %v2720 = vadd.f32 %v2718, %v2719
      %2721 = vadd.xlane.f32.xlu0 %v2720
      %v2722 = vpop.xlane.xlu0 %2721
      %v2723 = vsel %vm295, %v2582, 0.0
      %v2724 = vsel %vm295, %v2583, 0.0
      %v2725 = vadd.f32 %v2723, %v2724
      %v2726 = vsel %vm295, %v2584, 0.0
      %v2727 = vadd.f32 %v2725, %v2726
      %v2728 = vsel %vm295, %v2585, 0.0
      %v2729 = vadd.f32 %v2727, %v2728
      %v2730 = vsel %vm295, %v2586, 0.0
      %v2731 = vadd.f32 %v2729, %v2730
      %v2732 = vsel %vm295, %v2587, 0.0
      %v2733 = vadd.f32 %v2731, %v2732
      %v2734 = vsel %vm295, %v2588, 0.0
      %v2735 = vadd.f32 %v2733, %v2734
      %v2736 = vsel %vm295, %v2589, 0.0
      %v2737 = vadd.f32 %v2735, %v2736
      %v2738 = vsel %vm461, %v2590, 0.0
      %v2739 = vadd.f32 %v2737, %v2738
      %2740 = vadd.xlane.f32.xlu0 %v2739
      %v2741 = vpop.xlane.xlu0 %2740
      %v2742 = vadd.f32 %v2601, %v2612
      %v2743 = vadd.f32 %v2742, %v2623
      %v2744 = vadd.f32 %v2743, %v2634
      %v2745 = vadd.f32 %v2744, %v2645
      %v2746 = vadd.f32 %v2745, %v2656
      %v2747 = vadd.f32 %v2746, %v2667
      %v2748 = vadd.f32 %v2747, %v2678
      %v2749 = vadd.f32 %v2748, %v2689
      %v2750 = vadd.f32 %v2749, %v2700
      %v2751 = vadd.f32 %v2750, %v2711
      %v2752 = vadd.f32 %v2751, %v2722
      %v2753 = vsel %vm295, %v2741, 0.0
      %v2754 = vadd.f32 %v2752, %v2753
      %v2755 = vrot.slane %v2754, 4
      %v2756 = vadd.f32 %v2754, %v2755
      %v2757 = vrot.slane %v2756, 2
      %v2758 = vadd.f32 %v2756, %v2757
      %v2759 = vrot.slane %v2758, 1
      %v2760 = vadd.f32 %v2758, %v2759
      %vm2761 = vcmp.eq.s32.totalorder %v1131, 3
      %v2762 = vsel %vm2761, %v2760, 0.0
      %v2763 = vadd.f32 %v2355, %v2762
      %2764 = vst [vmem:[%s166] sm:$0x1] %v2763
      %p2765 = scmp.lt.s32.totalorder %s14, 1
      %s2766 = scalar_select %p2765, %s14, 1
      %s2767 = scalar_lea.vmem %s3, %s2766
      // Predicated region
      $region33: #{dense_classifier_forward.1} parent=31 // pred_check
        %p2768 = pneg %p100
      $region34: #{dense_classifier_forward.1} parent=31 // pred_check_branch
        %2770 = sbr.rel (%p2768) target = $region36
      $region35: #{dense_classifier_forward.1} parent=31 // pred_region
        _
      $region36: #{dense_classifier_forward.1} parent=31 // pred_fallthru
        _
    $region32: #{dense_classifier_forward.1} parent=5 // pred_fallthru
      _
    %p2771 = scmp.le.s32.totalorder 2, %s9
    // Predicated region
    $region37: #{dense_classifier_forward.1} parent=5 // pred_check
      %p2772 = pneg %p2771
    $region38: #{dense_classifier_forward.1} parent=5 // pred_check_branch
      %2774 = sbr.rel (%p2772) target = $region40
    $region39: #{dense_classifier_forward.1} parent=5 // pred_region
      %s2775 = ssub.s32 %s9, 2
      // Predicated region
      $region41: #{dense_classifier_forward.1} parent=39 // pred_check
        %p2776 = pneg %p106
      $region42: #{dense_classifier_forward.1} parent=39 // pred_check_branch
        %2778 = sbr.rel (%p2776) target = $region44
      $region43: #{dense_classifier_forward.1} parent=39 // pred_region
        %p2779 = scmp.lt.s32.totalorder %s15, 1
        %s2780 = scalar_select %p2779, %s15, 1
        %s2781 = scalar_lea.vmem %s3, %s2780
      $region44: #{dense_classifier_forward.1} parent=39 // pred_fallthru
        _
    $region40: #{dense_classifier_forward.1} parent=5 // pred_fallthru
      _
  $region6: #{dense_classifier_forward.1} parent=0 // loop_footer
    %s13 = sadd.s32 1, %s9
  $region7: #{dense_classifier_forward.1} parent=0 // loop_footer_branch
    %8 = sbr.rel target = $region3
  $region8: #{dense_classifier_forward.1} parent=0 // loop_exit
    _

</llo_original>
